<compile_context>
chip_gen: v7x
topology: tpu7x:2x2x1
jax: 0.10.0
libtpu: 0.0.40
codegen_flags: <defaults>
</compile_context>

<pallas_src>
import functools
import numpy as np
import jax
import jax.numpy as jnp
from jax.experimental import pallas as pl
from jax.experimental.pallas import tpu as pltpu


# ----------------------------------------------------------------------------
# Fused kernel: one grid step per Bt batch elements.
# ----------------------------------------------------------------------------
def _mix_attn_kernel(qd_ref, qt_ref, kd_ref, kt_ref, vt_ref,
                     w_ref, b_ref, fcw_ref, fcb_ref, g_ref, beta_ref,
                     o_ref, *, head_num, atten_dim, residual, eps):
    bf, f32 = jnp.bfloat16, jnp.float32
    H, D = head_num, atten_dim

    bt, lq, M = qd_ref.shape
    lk = kd_ref.shape[1]
    rows_q, rows_k = bt * lq, bt * lk

    # Flatten (Bt, L, M) -> (Bt*L, M): all batch rows share the projection /
    # fc / LayerNorm matmuls, so the MXU sees Bt*L rows instead of L.
    q_data = qd_ref[...].reshape(rows_q, M)            # fp32 (also residual)
    q_time = qt_ref[...].reshape(rows_q, M)            # bf16
    k_data = kd_ref[...].reshape(rows_k, M)            # bf16
    k_time = kt_ref[...].reshape(rows_k, M)            # bf16
    v_time = vt_ref[...].reshape(rows_k, M)            # bf16

    def proj(x, i):
        # bf16 MXU operands, fp32 accumulation; bias add in fp32.
        return (jnp.dot(x.astype(bf), w_ref[i], preferred_element_type=f32)
                + b_ref[i])

    # 1/sqrt(atten_dim) is already folded into w_ref[0:2] / b_ref[0:2].
    qd = proj(q_data, 0)        # (Bt*Lq, H*D)
    qt = proj(q_time, 1)
    kd = proj(k_data, 2)        # (Bt*Lk, H*D)
    kt = proj(k_time, 3)
    v = proj(v_time, 4)

    def heads(x, L):            # (Bt*L, H*D) -> (Bt*H, L, D), bf16
        return (jnp.transpose(x.reshape(bt, L, H, D), (0, 2, 1, 3))
                .reshape(bt * H, L, D).astype(bf))

    qd_h, qt_h = heads(qd, lq), heads(qt, lq)
    kd_h, kt_h = heads(kd, lk), heads(kt, lk)
    v_h = heads(v, lk)

    # Scores, batched over (Bt*H): two dot_generals summed (no per-head
    # concatenates, no explicit .T).
    s = (jnp.einsum('bqd,bkd->bqk', qd_h, kd_h, preferred_element_type=f32)
         + jnp.einsum('bqd,bkd->bqk', qt_h, kt_h, preferred_element_type=f32))

    # Softmax with deferred normalization (scale ctx, not p).
    s = s - jnp.max(s, axis=-1, keepdims=True)
    p = jnp.exp(s)
    denom = jnp.sum(p, axis=-1, keepdims=True)          # (Bt*H, Lq, 1)
    ctx = jnp.einsum('bqk,bkd->bqd', p.astype(bf), v_h,
                     preferred_element_type=f32)         # (Bt*H, Lq, D)
    ctx = ctx * pl.reciprocal(denom, approx=True)

    # Back to (Bt*Lq, H*D) layout for the fc matmul.
    ctx = (jnp.transpose(ctx.reshape(bt, H, lq, D), (0, 2, 1, 3))
           .reshape(rows_q, H * D))

    out = (jnp.dot(ctx.astype(bf), fcw_ref[...], preferred_element_type=f32)
           + fcb_ref[...])
    # TODO(synk): dropout is treated as identity (inference mode / p = 0).
    if residual:
        out = out + q_data.astype(f32)

    # LayerNorm with one-pass statistics: var = E[x^2] - E[x]^2.
    mu = jnp.mean(out, axis=-1, keepdims=True)
    ex2 = jnp.mean(out * out, axis=-1, keepdims=True)
    var = ex2 - mu * mu
    normed = (out - mu) * jax.lax.rsqrt(var + eps)
    o_ref[...] = (normed * g_ref[...] + beta_ref[...]).reshape(bt, lq, M)


# ----------------------------------------------------------------------------
# Tile-size / VMEM helpers (static, trace-time Python ints only).
# ----------------------------------------------------------------------------
def _estimate_vmem_bytes(bt, lq, lk, m, hd, head_num):
    f32, bf16 = 4, 2
    rows_q, rows_k = bt * lq, bt * lk
    # Activation blocks (double-buffered): Q_data fp32, 4 bf16 streams, fp32 out.
    io = 2 * (rows_q * m * (f32 + bf16) + 3 * rows_k * m * bf16
              + rows_q * m * f32)
    # Constants (single-buffered via pl.Buffered(1)).
    consts = 5 * m * hd * bf16 + 5 * hd * f32 + hd * m * bf16 + 3 * m * f32
    # Live in-kernel temporaries (projections, scores/probs, ctx, fc/LN).
    tmp = ((2 * rows_q + 3 * rows_k) * hd * (f32 + bf16)
           + 2 * bt * head_num * lq * lk * f32
           + 2 * rows_q * hd * f32
           + 3 * rows_q * m * f32)
    return io + consts + tmp


def _pick_batch_tile(B, Lq, Lk, M, HD, head_num,
                     target_rows=256, vmem_budget=48 << 20):
    # Largest Bt (a divisor of B) such that Bt*Lq approaches target_rows,
    # the footprint fits the v7x VMEM budget, and (for v7x megacore) at
    # least 2 grid steps remain when B >= 2.
    bt = max(1, min(B, -(-target_rows // max(Lq, 1))))
    if B >= 2:
        bt = min(bt, B // 2)
    bt = max(bt, 1)
    while B % bt:
        bt -= 1
    while bt > 1 and _estimate_vmem_bytes(bt, Lq, Lk, M, HD, head_num) > vmem_budget:
        bt -= 1
        while B % bt:
            bt -= 1
    return bt


# ----------------------------------------------------------------------------
# Wrapper: weight prep (scale folding, stacking, bf16 cast) + one pallas_call.
# ----------------------------------------------------------------------------
def mix_attention2_forward(params, Q_data, Q_time, K_data, K_time, V_time,
                           head_num, atten_dim, residual, batch_tile=None):
    B, Lq, M = Q_data.shape
    Lk = K_data.shape[1]
    HD = head_num * atten_dim
    scale = 1.0 / np.sqrt(atten_dim)

    bt = batch_tile if batch_tile is not None else _pick_batch_tile(
        B, Lq, Lk, M, HD, head_num)
    assert B % bt == 0, f"batch tile {bt} must divide batch {B}"
    n_steps = B // bt

    # Fold the softmax scale into the Q projections; stack weights/biases so
    # the kernel takes one weight ref and one bias ref.
    w_stack = jnp.stack([
        params["W_Q_data_w"] * scale,
        params["W_Q_time_w"] * scale,
        params["W_K_data_w"],
        params["W_K_time_w"],
        params["W_V_time_w"],
    ]).astype(jnp.bfloat16)                                   # (5, M, HD)
    b_stack = jnp.stack([
        params["W_Q_data_b"] * scale,
        params["W_Q_time_b"] * scale,
        params["W_K_data_b"],
        params["W_K_time_b"],
        params["W_V_time_b"],
    ]).astype(jnp.float32)                                    # (5, 1, HD)
    fc_w = params["fc_w"].astype(jnp.bfloat16)                # (HD, M)

    # bf16 activation streams (halves HBM reads on the bandwidth-bound path).
    # Q_data stays fp32: it is the residual feeding the fp32 LayerNorm.
    Q_time_b = Q_time.astype(jnp.bfloat16)
    K_data_b = K_data.astype(jnp.bfloat16)
    K_time_b = K_time.astype(jnp.bfloat16)
    V_time_b = V_time.astype(jnp.bfloat16)

    kernel = functools.partial(
        _mix_attn_kernel, head_num=head_num, atten_dim=atten_dim,
        residual=residual, eps=1e-5)

    act_q = pl.BlockSpec((bt, Lq, M), lambda b: (b, 0, 0))
    act_k = pl.BlockSpec((bt, Lk, M), lambda b: (b, 0, 0))

    def const_spec(shape):
        # Constant-index operands: single buffer (no DMA saved by double
        # buffering, only VMEM wasted -- matters on v7x's 64 MiB).
        return pl.BlockSpec(shape, lambda b: (0,) * len(shape),
                            pipeline_mode=pl.Buffered(1))

    est = _estimate_vmem_bytes(bt, Lq, Lk, M, HD, head_num)
    vmem_limit = int(min(64 << 20, max(32 << 20, 2 * est)))

    out = pl.pallas_call(
        kernel,
        out_shape=jax.ShapeDtypeStruct((B, Lq, M), jnp.float32),
        grid=(n_steps,),
        in_specs=[act_q, act_q, act_k, act_k, act_k,
                  const_spec((5, M, HD)), const_spec((5, 1, HD)),
                  const_spec((HD, M)), const_spec((1, M)),
                  const_spec((1, M)), const_spec((1, M))],
        out_specs=act_q,
        compiler_params=pltpu.CompilerParams(
            dimension_semantics=("parallel",),
            vmem_limit_bytes=vmem_limit),
    )(Q_data, Q_time_b, K_data_b, K_time_b, V_time_b,
      w_stack, b_stack, fc_w, params["fc_b"],
      params["ln_gamma"], params["ln_beta"])
    return out


# ----------------------------------------------------------------------------
# Pure-JAX fp32 reference (sanity check)
# ----------------------------------------------------------------------------
def reference_forward(params, Q_data, Q_time, K_data, K_time, V_time,
                      head_num, atten_dim, residual):
    B, Lq, M = Q_data.shape

    def proj(x, name):
        L = x.shape[1]
        y = x.reshape(B * L, M) @ params[name + "_w"] + params[name + "_b"]
        return y.reshape(B, L, head_num, atten_dim).transpose(0, 2, 1, 3)

    qd, qt = proj(Q_data, "W_Q_data"), proj(Q_time, "W_Q_time")
    kd, kt = proj(K_data, "W_K_data"), proj(K_time, "W_K_time")
    vt = proj(V_time, "W_V_time")
    scale = 1.0 / np.sqrt(atten_dim)
    s = (jnp.einsum("bhqd,bhkd->bhqk", qd, kd)
         + jnp.einsum("bhqd,bhkd->bhqk", qt, kt)) * scale
    p = jax.nn.softmax(s, axis=-1)
    ctx = jnp.einsum("bhqk,bhkd->bhqd", p, vt)
    ctx = ctx.transpose(0, 2, 1, 3).reshape(B * Lq, head_num * atten_dim)
    out = ctx @ params["fc_w"] + params["fc_b"]
    if residual:
        out = out + Q_data.reshape(B * Lq, M)
    mu = jnp.mean(out, axis=-1, keepdims=True)
    var = jnp.mean((out - mu) ** 2, axis=-1, keepdims=True)
    out = (out - mu) * jax.lax.rsqrt(var + 1e-5)
    out = out * params["ln_gamma"] + params["ln_beta"]
    return out.reshape(B, Lq, M)


# ----------------------------------------------------------------------------
# Deterministic synthetic parameters (not a checkpoint load)
# ----------------------------------------------------------------------------
def init_params(key, model_dim, atten_dim, head_num):
    hd = atten_dim * head_num
    names = ["W_Q_data", "W_Q_time", "W_K_data", "W_K_time", "W_V_time"]
    params = {}
    keys = jax.random.split(key, len(names) * 2 + 4)
    ki = 0
    for n in names:
        params[n + "_w"] = 0.1 * jax.random.normal(
            keys[ki], (model_dim, hd), jnp.float32); ki += 1
        params[n + "_b"] = 0.1 * jax.random.normal(
            keys[ki], (1, hd), jnp.float32); ki += 1
    params["fc_w"] = 0.1 * jax.random.normal(
        keys[ki], (hd, model_dim), jnp.float32); ki += 1
    params["fc_b"] = 0.1 * jax.random.normal(
        keys[ki], (1, model_dim), jnp.float32); ki += 1
    params["ln_gamma"] = 1.0 + 0.05 * jax.random.normal(
        keys[ki], (1, model_dim), jnp.float32); ki += 1
    params["ln_beta"] = 0.05 * jax.random.normal(
        keys[ki], (1, model_dim), jnp.float32); ki += 1
    return params


if __name__ == "__main__":
    B, Lq, Lk = 2, 8, 8
    model_dim, atten_dim, head_num = 32, 8, 4
    residual = True  # dropout = 0.0 (identity)

    key = jax.random.PRNGKey(0)
    kp, k1, k2, k3, k4, k5 = jax.random.split(key, 6)
    params = init_params(kp, model_dim, atten_dim, head_num)

    Q_data = jax.random.normal(k1, (B, Lq, model_dim), jnp.float32)
    Q_time = jax.random.normal(k2, (B, Lq, model_dim), jnp.float32)
    K_data = jax.random.normal(k3, (B, Lk, model_dim), jnp.float32)
    K_time = jax.random.normal(k4, (B, Lk, model_dim), jnp.float32)
    V_time = jax.random.normal(k5, (B, Lk, model_dim), jnp.float32)

    fwd = jax.jit(mix_attention2_forward, static_argnums=(6, 7, 8))
    out = fwd(params, Q_data, Q_time, K_data, K_time, V_time,
              head_num, atten_dim, residual)
    out = jax.block_until_ready(out)

    ref = reference_forward(params, Q_data, Q_time, K_data, K_time, V_time,
                            head_num, atten_dim, residual)
    assert out.shape == (B, Lq, model_dim)
    # bf16 MXU operands (fp32 accumulation) -> slightly looser tolerance.
    err = np.abs(np.asarray(out) - np.asarray(ref)).max()
    assert np.allclose(np.asarray(out), np.asarray(ref),
                       rtol=2e-2, atol=2e-2), f"max abs err {err}"

    print("KERNEL_OK")
</pallas_src>

<mosaic_0001>
module attributes {stable_mosaic.version = 11 : i64} {
  func.func @_mix_attn_kernel(%arg0: i32, %arg1: memref<1x8x32xf32, #tpu.memory_space<vmem>>, %arg2: memref<1x8x32xbf16, #tpu.memory_space<vmem>>, %arg3: memref<1x8x32xbf16, #tpu.memory_space<vmem>>, %arg4: memref<1x8x32xbf16, #tpu.memory_space<vmem>>, %arg5: memref<1x8x32xbf16, #tpu.memory_space<vmem>>, %arg6: memref<5x32x32xbf16, #tpu.memory_space<vmem>>, %arg7: memref<5x1x32xf32, #tpu.memory_space<vmem>>, %arg8: memref<32x32xbf16, #tpu.memory_space<vmem>>, %arg9: memref<1x32xf32, #tpu.memory_space<vmem>>, %arg10: memref<1x32xf32, #tpu.memory_space<vmem>>, %arg11: memref<1x32xf32, #tpu.memory_space<vmem>>, %arg12: memref<1x8x32xf32, #tpu.memory_space<vmem>>) attributes {dimension_semantics = [#tpu.dimension_semantics<parallel>], iteration_bounds = array<i64: 2>, scalar_prefetch = 0 : i64, scratch_operands = 0 : i64, tpu.core_type = #tpu.core_type<tc>, window_params = [{transform_indices = @transform_0, window_bounds = array<i64: 1, 8, 32>}, {transform_indices = @transform_1, window_bounds = array<i64: 1, 8, 32>}, {transform_indices = @transform_2, window_bounds = array<i64: 1, 8, 32>}, {transform_indices = @transform_3, window_bounds = array<i64: 1, 8, 32>}, {transform_indices = @transform_4, window_bounds = array<i64: 1, 8, 32>}, {pipeline_mode = #tpu.pipeline_mode<synchronous>, transform_indices = @transform_5, window_bounds = array<i64: 5, 32, 32>}, {pipeline_mode = #tpu.pipeline_mode<synchronous>, transform_indices = @transform_6, window_bounds = array<i64: 5, 1, 32>}, {pipeline_mode = #tpu.pipeline_mode<synchronous>, transform_indices = @transform_7, window_bounds = array<i64: 32, 32>}, {pipeline_mode = #tpu.pipeline_mode<synchronous>, transform_indices = @transform_8, window_bounds = array<i64: 1, 32>}, {pipeline_mode = #tpu.pipeline_mode<synchronous>, transform_indices = @transform_9, window_bounds = array<i64: 1, 32>}, {pipeline_mode = #tpu.pipeline_mode<synchronous>, transform_indices = @transform_10, window_bounds = array<i64: 1, 32>}, {transform_indices = @transform_11, window_bounds = array<i64: 1, 8, 32>}]} {
    %c0 = arith.constant 0 : index
    %c0_0 = arith.constant 0 : index
    %c0_1 = arith.constant 0 : index
    %0 = vector.load %arg1[%c0, %c0_0, %c0_1] : memref<1x8x32xf32, #tpu.memory_space<vmem>>, vector<1x8x32xf32>
    %1 = vector.shape_cast %0 : vector<1x8x32xf32> to vector<8x32xf32>
    %c0_2 = arith.constant 0 : index
    %c0_3 = arith.constant 0 : index
    %c0_4 = arith.constant 0 : index
    %2 = vector.load %arg2[%c0_2, %c0_3, %c0_4] : memref<1x8x32xbf16, #tpu.memory_space<vmem>>, vector<1x8x32xbf16>
    %3 = vector.shape_cast %2 : vector<1x8x32xbf16> to vector<8x32xbf16>
    %c0_5 = arith.constant 0 : index
    %c0_6 = arith.constant 0 : index
    %c0_7 = arith.constant 0 : index
    %4 = vector.load %arg3[%c0_5, %c0_6, %c0_7] : memref<1x8x32xbf16, #tpu.memory_space<vmem>>, vector<1x8x32xbf16>
    %5 = vector.shape_cast %4 : vector<1x8x32xbf16> to vector<8x32xbf16>
    %c0_8 = arith.constant 0 : index
    %c0_9 = arith.constant 0 : index
    %c0_10 = arith.constant 0 : index
    %6 = vector.load %arg4[%c0_8, %c0_9, %c0_10] : memref<1x8x32xbf16, #tpu.memory_space<vmem>>, vector<1x8x32xbf16>
    %7 = vector.shape_cast %6 : vector<1x8x32xbf16> to vector<8x32xbf16>
    %c0_11 = arith.constant 0 : index
    %c0_12 = arith.constant 0 : index
    %c0_13 = arith.constant 0 : index
    %8 = vector.load %arg5[%c0_11, %c0_12, %c0_13] : memref<1x8x32xbf16, #tpu.memory_space<vmem>>, vector<1x8x32xbf16>
    %9 = vector.shape_cast %8 : vector<1x8x32xbf16> to vector<8x32xbf16>
    %10 = arith.truncf %1 : vector<8x32xf32> to vector<8x32xbf16>
    %c0_14 = arith.constant 0 : index
    %c0_15 = arith.constant 0 : index
    %c0_16 = arith.constant 0 : index
    %11 = vector.load %arg6[%c0_14, %c0_15, %c0_16] : memref<5x32x32xbf16, #tpu.memory_space<vmem>>, vector<1x32x32xbf16>
    %12 = vector.shape_cast %11 : vector<1x32x32xbf16> to vector<32x32xbf16>
    %cst = arith.constant dense<0.000000e+00> : vector<8x32xf32>
    %13 = tpu.matmul %10, %12, %cst {dimension_numbers = #tpu.dot_dimension_numbers<[1], [0], [0], [1], [0, 0, 1, 1], [], []>} : vector<8x32xbf16>, vector<32x32xbf16>, vector<8x32xf32> -> vector<8x32xf32>
    %c0_17 = arith.constant 0 : index
    %c0_18 = arith.constant 0 : index
    %c0_19 = arith.constant 0 : index
    %14 = vector.load %arg7[%c0_17, %c0_18, %c0_19] : memref<5x1x32xf32, #tpu.memory_space<vmem>>, vector<1x1x32xf32>
    %15 = vector.shape_cast %14 : vector<1x1x32xf32> to vector<1x32xf32>
    %16 = vector.broadcast %15 : vector<1x32xf32> to vector<8x32xf32>
    %17 = arith.addf %13, %16 : vector<8x32xf32>
    %c1 = arith.constant 1 : index
    %c0_20 = arith.constant 0 : index
    %c0_21 = arith.constant 0 : index
    %18 = vector.load %arg6[%c1, %c0_20, %c0_21] : memref<5x32x32xbf16, #tpu.memory_space<vmem>>, vector<1x32x32xbf16>
    %19 = vector.shape_cast %18 : vector<1x32x32xbf16> to vector<32x32xbf16>
    %cst_22 = arith.constant dense<0.000000e+00> : vector<8x32xf32>
    %20 = tpu.matmul %3, %19, %cst_22 {dimension_numbers = #tpu.dot_dimension_numbers<[1], [0], [0], [1], [0, 0, 1, 1], [], []>} : vector<8x32xbf16>, vector<32x32xbf16>, vector<8x32xf32> -> vector<8x32xf32>
    %c1_23 = arith.constant 1 : index
    %c0_24 = arith.constant 0 : index
    %c0_25 = arith.constant 0 : index
    %21 = vector.load %arg7[%c1_23, %c0_24, %c0_25] : memref<5x1x32xf32, #tpu.memory_space<vmem>>, vector<1x1x32xf32>
    %22 = vector.shape_cast %21 : vector<1x1x32xf32> to vector<1x32xf32>
    %23 = vector.broadcast %22 : vector<1x32xf32> to vector<8x32xf32>
    %24 = arith.addf %20, %23 : vector<8x32xf32>
    %c2 = arith.constant 2 : index
    %c0_26 = arith.constant 0 : index
    %c0_27 = arith.constant 0 : index
    %25 = vector.load %arg6[%c2, %c0_26, %c0_27] : memref<5x32x32xbf16, #tpu.memory_space<vmem>>, vector<1x32x32xbf16>
    %26 = vector.shape_cast %25 : vector<1x32x32xbf16> to vector<32x32xbf16>
    %cst_28 = arith.constant dense<0.000000e+00> : vector<8x32xf32>
    %27 = tpu.matmul %5, %26, %cst_28 {dimension_numbers = #tpu.dot_dimension_numbers<[1], [0], [0], [1], [0, 0, 1, 1], [], []>} : vector<8x32xbf16>, vector<32x32xbf16>, vector<8x32xf32> -> vector<8x32xf32>
    %c2_29 = arith.constant 2 : index
    %c0_30 = arith.constant 0 : index
    %c0_31 = arith.constant 0 : index
    %28 = vector.load %arg7[%c2_29, %c0_30, %c0_31] : memref<5x1x32xf32, #tpu.memory_space<vmem>>, vector<1x1x32xf32>
    %29 = vector.shape_cast %28 : vector<1x1x32xf32> to vector<1x32xf32>
    %30 = vector.broadcast %29 : vector<1x32xf32> to vector<8x32xf32>
    %31 = arith.addf %27, %30 : vector<8x32xf32>
    %c3 = arith.constant 3 : index
    %c0_32 = arith.constant 0 : index
    %c0_33 = arith.constant 0 : index
    %32 = vector.load %arg6[%c3, %c0_32, %c0_33] : memref<5x32x32xbf16, #tpu.memory_space<vmem>>, vector<1x32x32xbf16>
    %33 = vector.shape_cast %32 : vector<1x32x32xbf16> to vector<32x32xbf16>
    %cst_34 = arith.constant dense<0.000000e+00> : vector<8x32xf32>
    %34 = tpu.matmul %7, %33, %cst_34 {dimension_numbers = #tpu.dot_dimension_numbers<[1], [0], [0], [1], [0, 0, 1, 1], [], []>} : vector<8x32xbf16>, vector<32x32xbf16>, vector<8x32xf32> -> vector<8x32xf32>
    %c3_35 = arith.constant 3 : index
    %c0_36 = arith.constant 0 : index
    %c0_37 = arith.constant 0 : index
    %35 = vector.load %arg7[%c3_35, %c0_36, %c0_37] : memref<5x1x32xf32, #tpu.memory_space<vmem>>, vector<1x1x32xf32>
    %36 = vector.shape_cast %35 : vector<1x1x32xf32> to vector<1x32xf32>
    %37 = vector.broadcast %36 : vector<1x32xf32> to vector<8x32xf32>
    %38 = arith.addf %34, %37 : vector<8x32xf32>
    %c4 = arith.constant 4 : index
    %c0_38 = arith.constant 0 : index
    %c0_39 = arith.constant 0 : index
    %39 = vector.load %arg6[%c4, %c0_38, %c0_39] : memref<5x32x32xbf16, #tpu.memory_space<vmem>>, vector<1x32x32xbf16>
    %40 = vector.shape_cast %39 : vector<1x32x32xbf16> to vector<32x32xbf16>
    %cst_40 = arith.constant dense<0.000000e+00> : vector<8x32xf32>
    %41 = tpu.matmul %9, %40, %cst_40 {dimension_numbers = #tpu.dot_dimension_numbers<[1], [0], [0], [1], [0, 0, 1, 1], [], []>} : vector<8x32xbf16>, vector<32x32xbf16>, vector<8x32xf32> -> vector<8x32xf32>
    %c4_41 = arith.constant 4 : index
    %c0_42 = arith.constant 0 : index
    %c0_43 = arith.constant 0 : index
    %42 = vector.load %arg7[%c4_41, %c0_42, %c0_43] : memref<5x1x32xf32, #tpu.memory_space<vmem>>, vector<1x1x32xf32>
    %43 = vector.shape_cast %42 : vector<1x1x32xf32> to vector<1x32xf32>
    %44 = vector.broadcast %43 : vector<1x32xf32> to vector<8x32xf32>
    %45 = arith.addf %41, %44 : vector<8x32xf32>
    %46 = vector.shape_cast %17 : vector<8x32xf32> to vector<1x8x4x8xf32>
    %47 = tpu.transpose %46, [0, 2, 1, 3] : vector<1x8x4x8xf32> -> vector<1x4x8x8xf32>
    %48 = vector.shape_cast %47 : vector<1x4x8x8xf32> to vector<4x8x8xf32>
    %49 = arith.truncf %48 : vector<4x8x8xf32> to vector<4x8x8xbf16>
    %50 = vector.shape_cast %24 : vector<8x32xf32> to vector<1x8x4x8xf32>
    %51 = tpu.transpose %50, [0, 2, 1, 3] : vector<1x8x4x8xf32> -> vector<1x4x8x8xf32>
    %52 = vector.shape_cast %51 : vector<1x4x8x8xf32> to vector<4x8x8xf32>
    %53 = arith.truncf %52 : vector<4x8x8xf32> to vector<4x8x8xbf16>
    %54 = vector.shape_cast %31 : vector<8x32xf32> to vector<1x8x4x8xf32>
    %55 = tpu.transpose %54, [0, 2, 1, 3] : vector<1x8x4x8xf32> -> vector<1x4x8x8xf32>
    %56 = vector.shape_cast %55 : vector<1x4x8x8xf32> to vector<4x8x8xf32>
    %57 = arith.truncf %56 : vector<4x8x8xf32> to vector<4x8x8xbf16>
    %58 = vector.shape_cast %38 : vector<8x32xf32> to vector<1x8x4x8xf32>
    %59 = tpu.transpose %58, [0, 2, 1, 3] : vector<1x8x4x8xf32> -> vector<1x4x8x8xf32>
    %60 = vector.shape_cast %59 : vector<1x4x8x8xf32> to vector<4x8x8xf32>
    %61 = arith.truncf %60 : vector<4x8x8xf32> to vector<4x8x8xbf16>
    %62 = vector.shape_cast %45 : vector<8x32xf32> to vector<1x8x4x8xf32>
    %63 = tpu.transpose %62, [0, 2, 1, 3] : vector<1x8x4x8xf32> -> vector<1x4x8x8xf32>
    %64 = vector.shape_cast %63 : vector<1x4x8x8xf32> to vector<4x8x8xf32>
    %65 = arith.truncf %64 : vector<4x8x8xf32> to vector<4x8x8xbf16>
    "tpu.trace_start"() <{level = 10 : i32, message = "bqd,bkd->bqk"}> : () -> ()
    %cst_44 = arith.constant dense<0.000000e+00> : vector<4x8x8xf32>
    %66 = tpu.matmul %49, %57, %cst_44 {dimension_numbers = #tpu.dot_dimension_numbers<[2], [2], [1], [1], [0, 0, 0, 1, 1, 1], [0], [0]>} : vector<4x8x8xbf16>, vector<4x8x8xbf16>, vector<4x8x8xf32> -> vector<4x8x8xf32>
    %cst_45 = arith.constant dense<0.000000e+00> : vector<4x8x8xf32>
    %67 = tpu.matmul %53, %61, %cst_45 {dimension_numbers = #tpu.dot_dimension_numbers<[2], [2], [1], [1], [0, 0, 0, 1, 1, 1], [0], [0]>} : vector<4x8x8xbf16>, vector<4x8x8xbf16>, vector<4x8x8xf32> -> vector<4x8x8xf32>
    "tpu.trace_stop"() : () -> ()
    %68 = arith.addf %66, %67 : vector<4x8x8xf32>
    %cst_46 = arith.constant dense<0xFF800000> : vector<4x8xf32>
    %69 = vector.multi_reduction <maximumf>, %68, %cst_46 [2] : vector<4x8x8xf32> to vector<4x8xf32>
    %70 = vector.shape_cast %69 : vector<4x8xf32> to vector<4x8x1xf32>
    %71 = vector.broadcast %70 : vector<4x8x1xf32> to vector<4x8x8xf32>
    %72 = arith.subf %68, %71 : vector<4x8x8xf32>
    %73 = math.exp %72 : vector<4x8x8xf32>
    %cst_47 = arith.constant dense<0.000000e+00> : vector<4x8xf32>
    %74 = vector.multi_reduction <add>, %73, %cst_47 [2] : vector<4x8x8xf32> to vector<4x8xf32>
    %75 = vector.shape_cast %74 : vector<4x8xf32> to vector<4x8x1xf32>
    %76 = arith.truncf %73 : vector<4x8x8xf32> to vector<4x8x8xbf16>
    "tpu.trace_start"() <{level = 10 : i32, message = "bqk,bkd->bqd"}> : () -> ()
    %cst_48 = arith.constant dense<0.000000e+00> : vector<4x8x8xf32>
    %77 = tpu.matmul %76, %65, %cst_48 {dimension_numbers = #tpu.dot_dimension_numbers<[2], [1], [1], [2], [0, 0, 0, 1, 1, 2], [0], [0]>} : vector<4x8x8xbf16>, vector<4x8x8xbf16>, vector<4x8x8xf32> -> vector<4x8x8xf32>
    "tpu.trace_stop"() : () -> ()
    %78 = tpu.reciprocal %75 {approx = true} : vector<4x8x1xf32> -> vector<4x8x1xf32>
    %79 = vector.broadcast %78 : vector<4x8x1xf32> to vector<4x8x8xf32>
    %80 = arith.mulf %77, %79 : vector<4x8x8xf32>
    %81 = vector.shape_cast %80 : vector<4x8x8xf32> to vector<1x4x8x8xf32>
    %82 = tpu.transpose %81, [0, 2, 1, 3] : vector<1x4x8x8xf32> -> vector<1x8x4x8xf32>
    %83 = vector.shape_cast %82 : vector<1x8x4x8xf32> to vector<8x32xf32>
    %84 = arith.truncf %83 : vector<8x32xf32> to vector<8x32xbf16>
    %c0_49 = arith.constant 0 : index
    %c0_50 = arith.constant 0 : index
    %85 = vector.load %arg8[%c0_49, %c0_50] : memref<32x32xbf16, #tpu.memory_space<vmem>>, vector<32x32xbf16>
    %cst_51 = arith.constant dense<0.000000e+00> : vector<8x32xf32>
    %86 = tpu.matmul %84, %85, %cst_51 {dimension_numbers = #tpu.dot_dimension_numbers<[1], [0], [0], [1], [0, 0, 1, 1], [], []>} : vector<8x32xbf16>, vector<32x32xbf16>, vector<8x32xf32> -> vector<8x32xf32>
    %c0_52 = arith.constant 0 : index
    %c0_53 = arith.constant 0 : index
    %87 = vector.load %arg9[%c0_52, %c0_53] : memref<1x32xf32, #tpu.memory_space<vmem>>, vector<1x32xf32>
    %88 = vector.broadcast %87 : vector<1x32xf32> to vector<8x32xf32>
    %89 = arith.addf %86, %88 : vector<8x32xf32>
    %90 = arith.addf %89, %1 : vector<8x32xf32>
    %cst_54 = arith.constant dense<0.000000e+00> : vector<8xf32>
    %91 = vector.multi_reduction <add>, %90, %cst_54 [1] : vector<8x32xf32> to vector<8xf32>
    %92 = vector.shape_cast %91 : vector<8xf32> to vector<8x1xf32>
    %cst_55 = arith.constant 3.200000e+01 : f32
    %93 = vector.broadcast %cst_55 : f32 to vector<8x1xf32>
    %94 = arith.divf %92, %93 : vector<8x1xf32>
    %95 = arith.mulf %90, %90 : vector<8x32xf32>
    %cst_56 = arith.constant dense<0.000000e+00> : vector<8xf32>
    %96 = vector.multi_reduction <add>, %95, %cst_56 [1] : vector<8x32xf32> to vector<8xf32>
    %97 = vector.shape_cast %96 : vector<8xf32> to vector<8x1xf32>
    %cst_57 = arith.constant 3.200000e+01 : f32
    %98 = vector.broadcast %cst_57 : f32 to vector<8x1xf32>
    %99 = arith.divf %97, %98 : vector<8x1xf32>
    %100 = arith.mulf %94, %94 : vector<8x1xf32>
    %101 = arith.subf %99, %100 : vector<8x1xf32>
    %102 = vector.broadcast %94 : vector<8x1xf32> to vector<8x32xf32>
    %103 = arith.subf %90, %102 : vector<8x32xf32>
    %cst_58 = arith.constant 9.99999974E-6 : f32
    %104 = vector.broadcast %cst_58 : f32 to vector<8x1xf32>
    %105 = arith.addf %101, %104 : vector<8x1xf32>
    %106 = math.rsqrt %105 : vector<8x1xf32>
    %107 = vector.broadcast %106 : vector<8x1xf32> to vector<8x32xf32>
    %108 = arith.mulf %103, %107 : vector<8x32xf32>
    %c0_59 = arith.constant 0 : index
    %c0_60 = arith.constant 0 : index
    %109 = vector.load %arg10[%c0_59, %c0_60] : memref<1x32xf32, #tpu.memory_space<vmem>>, vector<1x32xf32>
    %110 = vector.broadcast %109 : vector<1x32xf32> to vector<8x32xf32>
    %111 = arith.mulf %108, %110 : vector<8x32xf32>
    %c0_61 = arith.constant 0 : index
    %c0_62 = arith.constant 0 : index
    %112 = vector.load %arg11[%c0_61, %c0_62] : memref<1x32xf32, #tpu.memory_space<vmem>>, vector<1x32xf32>
    %113 = vector.broadcast %112 : vector<1x32xf32> to vector<8x32xf32>
    %114 = arith.addf %111, %113 : vector<8x32xf32>
    %115 = vector.shape_cast %114 : vector<8x32xf32> to vector<1x8x32xf32>
    %c0_63 = arith.constant 0 : index
    %c0_64 = arith.constant 0 : index
    %c0_65 = arith.constant 0 : index
    %116 = vector.load %arg12[%c0_63, %c0_64, %c0_65] : memref<1x8x32xf32, #tpu.memory_space<vmem>>, vector<1x8x32xf32>
    tpu.vector_store %arg12[%c0_63, %c0_64, %c0_65], %115 {strides = array<i32>} : memref<1x8x32xf32, #tpu.memory_space<vmem>>, vector<1x8x32xf32>,
    return
  }
  func.func @transform_0(%arg0: i32) -> (i32, i32, i32) {
    %c0_i32 = arith.constant 0 : i32
    %c0_i32_0 = arith.constant 0 : i32
    %c0_i32_1 = arith.constant 0 : i32
    return %arg0, %c0_i32, %c0_i32_0 : i32, i32, i32
  }
  func.func @transform_1(%arg0: i32) -> (i32, i32, i32) {
    %c0_i32 = arith.constant 0 : i32
    %c0_i32_0 = arith.constant 0 : i32
    %c0_i32_1 = arith.constant 0 : i32
    return %arg0, %c0_i32, %c0_i32_0 : i32, i32, i32
  }
  func.func @transform_2(%arg0: i32) -> (i32, i32, i32) {
    %c0_i32 = arith.constant 0 : i32
    %c0_i32_0 = arith.constant 0 : i32
    %c0_i32_1 = arith.constant 0 : i32
    return %arg0, %c0_i32, %c0_i32_0 : i32, i32, i32
  }
  func.func @transform_3(%arg0: i32) -> (i32, i32, i32) {
    %c0_i32 = arith.constant 0 : i32
    %c0_i32_0 = arith.constant 0 : i32
    %c0_i32_1 = arith.constant 0 : i32
    return %arg0, %c0_i32, %c0_i32_0 : i32, i32, i32
  }
  func.func @transform_4(%arg0: i32) -> (i32, i32, i32) {
    %c0_i32 = arith.constant 0 : i32
    %c0_i32_0 = arith.constant 0 : i32
    %c0_i32_1 = arith.constant 0 : i32
    return %arg0, %c0_i32, %c0_i32_0 : i32, i32, i32
  }
  func.func @transform_5(%arg0: i32) -> (i32, i32, i32) {
    %c0_i32 = arith.constant 0 : i32
    %c0_i32_0 = arith.constant 0 : i32
    %c0_i32_1 = arith.constant 0 : i32
    %c0_i32_2 = arith.constant 0 : i32
    return %c0_i32, %c0_i32_0, %c0_i32_1 : i32, i32, i32
  }
  func.func @transform_6(%arg0: i32) -> (i32, i32, i32) {
    %c0_i32 = arith.constant 0 : i32
    %c0_i32_0 = arith.constant 0 : i32
    %c0_i32_1 = arith.constant 0 : i32
    %c0_i32_2 = arith.constant 0 : i32
    return %c0_i32, %c0_i32_0, %c0_i32_1 : i32, i32, i32
  }
  func.func @transform_7(%arg0: i32) -> (i32, i32) {
    %c0_i32 = arith.constant 0 : i32
    %c0_i32_0 = arith.constant 0 : i32
    %c0_i32_1 = arith.constant 0 : i32
    return %c0_i32, %c0_i32_0 : i32, i32
  }
  func.func @transform_8(%arg0: i32) -> (i32, i32) {
    %c0_i32 = arith.constant 0 : i32
    %c0_i32_0 = arith.constant 0 : i32
    %c0_i32_1 = arith.constant 0 : i32
    return %c0_i32, %c0_i32_0 : i32, i32
  }
  func.func @transform_9(%arg0: i32) -> (i32, i32) {
    %c0_i32 = arith.constant 0 : i32
    %c0_i32_0 = arith.constant 0 : i32
    %c0_i32_1 = arith.constant 0 : i32
    return %c0_i32, %c0_i32_0 : i32, i32
  }
  func.func @transform_10(%arg0: i32) -> (i32, i32) {
    %c0_i32 = arith.constant 0 : i32
    %c0_i32_0 = arith.constant 0 : i32
    %c0_i32_1 = arith.constant 0 : i32
    return %c0_i32, %c0_i32_0 : i32, i32
  }
  func.func @transform_11(%arg0: i32) -> (i32, i32, i32) {
    %c0_i32 = arith.constant 0 : i32
    %c0_i32_0 = arith.constant 0 : i32
    %c0_i32_1 = arith.constant 0 : i32
    return %arg0, %c0_i32, %c0_i32_0 : i32, i32, i32
  }
}

</mosaic_0001>

<llo_original>
// kernel: mix_attention2_forward.1
$region0: #{mix_attention2_forward.1}
  #allocation0 [shape = 'u32[]', space=smem, size = 0x4, offset = 0x4, fixed_abs, tag = 'smem constant byte address 0x4 - core index']
  #allocation1 [shape = 'u32[144,128]{1,0:T(1,128)}', space=vmem, size = 0x12000, scoped, tag = 'internal scratch']
  %s0 = inlined_call_operand.vmem [shape: f32[2,8,32], index: 0, kind: input, shape index: {}]
  %s1 = inlined_call_operand.vmem [shape: bf16[2,8,32], index: 1, kind: input, shape index: {}]
  %s2 = inlined_call_operand.vmem [shape: bf16[2,8,32], index: 2, kind: input, shape index: {}]
  %s3 = inlined_call_operand.vmem [shape: bf16[2,8,32], index: 3, kind: input, shape index: {}]
  %s4 = inlined_call_operand.vmem [shape: bf16[2,8,32], index: 4, kind: input, shape index: {}]
  %s5 = inlined_call_operand.vmem [shape: bf16[5,32,32], index: 5, kind: input, shape index: {}]
  %s6 = inlined_call_operand.vmem [shape: f32[5,1,32], index: 6, kind: input, shape index: {}]
  %s7 = inlined_call_operand.vmem [shape: bf16[32,32], index: 7, kind: input, shape index: {}]
  %s8 = inlined_call_operand.vmem [shape: f32[1,32], index: 8, kind: input, shape index: {}]
  %s9 = inlined_call_operand.vmem [shape: f32[1,32], index: 9, kind: input, shape index: {}]
  %s10 = inlined_call_operand.vmem [shape: f32[1,32], index: 10, kind: input, shape index: {}]
  %s11 = inlined_call_operand.hbm [shape: f32[2,8,32], index: 11, kind: output, shape index: {}]
  %s12 = sld [smem:[#allocation0]]
  $region77: #{mix_attention2_forward.1} parent=0
    _
  %s14 = ssub.s32 1, %s12
  %s15 = scalar_select 0, %s14, %s12
  $region1: #{mix_attention2_forward.1} parent=0
    #allocation2 [shape = 'u8[8192]{0}', space=vmem, size = 0x2000, scoped, tag = 'output window, operand 0']
    #allocation3 [shape = 's32[2]{0}', space=sflag, size = 0x8, scoped, tag = 'scoped memory for mix_attention2_forward.1']
    %16 = vsyncpa [#allocation3], 0
    %s17 = scalar_lea.sflag [#allocation3], 1
    %18 = vsyncpa %s17, 0
    loop: start=0, step=1, limit=4
    $region2: #{mix_attention2_forward.1} parent=1 // loop_pre_header
      _
    $region3: #{mix_attention2_forward.1} parent=1 // loop_header
      %s20 = sphi 0, %s24
      %p21 = scmp.ge.s32.totalorder %s20, 4
      %s30 = sphi 0, %s32
      %s33 = sphi 0, %s30
      %s34 = sphi 0, %s33
      %s50 = sphi 0, %s34
      %s56 = sphi 0, %s58
      %s59 = sphi 0, %s56
      %s60 = sphi 0, %s59
      %s76 = sphi 0, %s60
      %s82 = sphi 0, %s84
      %s85 = sphi 0, %s82
      %s86 = sphi 0, %s85
      %s102 = sphi 0, %s86
      %s108 = sphi 0, %s110
      %s111 = sphi 0, %s108
      %s112 = sphi 0, %s111
      %s128 = sphi 0, %s112
      %s134 = sphi 0, %s136
      %s137 = sphi 0, %s134
      %s138 = sphi 0, %s137
      %s154 = sphi 0, %s138
      %s158 = sphi 0, %s158
      %s160 = sphi 0, %s158
      %s161 = sphi 0, %s160
      %s175 = sphi 0, %s161
      %s179 = sphi 0, %s179
      %s181 = sphi 0, %s179
      %s182 = sphi 0, %s181
      %s196 = sphi 0, %s182
      %s200 = sphi 0, %s200
      %s202 = sphi 0, %s200
      %s203 = sphi 0, %s202
      %s217 = sphi 0, %s203
      %s221 = sphi 0, %s221
      %s223 = sphi 0, %s221
      %s224 = sphi 0, %s223
      %s238 = sphi 0, %s224
      %s242 = sphi 0, %s242
      %s244 = sphi 0, %s242
      %s245 = sphi 0, %s244
      %s259 = sphi 0, %s245
      %s263 = sphi 0, %s263
      %s265 = sphi 0, %s263
      %s266 = sphi 0, %s265
      %s280 = sphi 0, %s266
      %s286 = sphi 0, %s288
      %s289 = sphi 0, %s286
      %s290 = sphi 0, %s289
      %s306 = sphi 0, %s290
    $region4: #{mix_attention2_forward.1} parent=1 // loop_header_branch
      %23 = sbr.rel (%p21) target = $region8
    $region5: #{mix_attention2_forward.1} parent=1 // loop_body
      %s25 = ssub.s32 %s20, 1
      %s26 = ssub.s32 %s20, 2
      %s27 = sadd.s32 %s20, 1
      %s28 = ssub.s32 %s20, %s27
      %p29 = scmp.eq.s32.totalorder %s28, 0
      %s31 = sadd.s32 %s30, 1
      %s32 = scalar_select %p29, %s30, %s31
      %p35 = pneg %p29
      %p36 = scmp.eq.s32.totalorder %s20, 1
      %p37 = por %p35, %p36
      %p38 = scmp.ne.s32.totalorder %s30, %s33
      %p39 = scmp.eq.s32.totalorder %s20, 0
      %p40 = por %p38, %p39
      %p41 = scmp.ne.s32.totalorder %s30, %s33
      %p42 = scmp.eq.s32.totalorder %s25, 1
      %p43 = por %p41, %p42
      %p44 = scmp.ne.s32.totalorder %s33, %s34
      %p45 = scmp.eq.s32.totalorder %s25, 0
      %p46 = por %p44, %p45
      %p47 = scmp.ne.s32.totalorder %s33, %s34
      %p48 = scmp.eq.s32.totalorder %s26, 1
      %p49 = por %p47, %p48
      %p51 = scmp.ne.s32.totalorder %s34, %s50
      %p52 = scmp.eq.s32.totalorder %s26, 0
      %p53 = por %p51, %p52
      %s54 = ssub.s32 %s20, %s27
      %p55 = scmp.eq.s32.totalorder %s54, 0
      %s57 = sadd.s32 %s56, 1
      %s58 = scalar_select %p55, %s56, %s57
      %p61 = pneg %p55
      %p62 = scmp.eq.s32.totalorder %s20, 1
      %p63 = por %p61, %p62
      %p64 = scmp.ne.s32.totalorder %s56, %s59
      %p65 = scmp.eq.s32.totalorder %s20, 0
      %p66 = por %p64, %p65
      %p67 = scmp.ne.s32.totalorder %s56, %s59
      %p68 = scmp.eq.s32.totalorder %s25, 1
      %p69 = por %p67, %p68
      %p70 = scmp.ne.s32.totalorder %s59, %s60
      %p71 = scmp.eq.s32.totalorder %s25, 0
      %p72 = por %p70, %p71
      %p73 = scmp.ne.s32.totalorder %s59, %s60
      %p74 = scmp.eq.s32.totalorder %s26, 1
      %p75 = por %p73, %p74
      %p77 = scmp.ne.s32.totalorder %s60, %s76
      %p78 = scmp.eq.s32.totalorder %s26, 0
      %p79 = por %p77, %p78
      %s80 = ssub.s32 %s20, %s27
      %p81 = scmp.eq.s32.totalorder %s80, 0
      %s83 = sadd.s32 %s82, 1
      %s84 = scalar_select %p81, %s82, %s83
      %p87 = pneg %p81
      %p88 = scmp.eq.s32.totalorder %s20, 1
      %p89 = por %p87, %p88
      %p90 = scmp.ne.s32.totalorder %s82, %s85
      %p91 = scmp.eq.s32.totalorder %s20, 0
      %p92 = por %p90, %p91
      %p93 = scmp.ne.s32.totalorder %s82, %s85
      %p94 = scmp.eq.s32.totalorder %s25, 1
      %p95 = por %p93, %p94
      %p96 = scmp.ne.s32.totalorder %s85, %s86
      %p97 = scmp.eq.s32.totalorder %s25, 0
      %p98 = por %p96, %p97
      %p99 = scmp.ne.s32.totalorder %s85, %s86
      %p100 = scmp.eq.s32.totalorder %s26, 1
      %p101 = por %p99, %p100
      %p103 = scmp.ne.s32.totalorder %s86, %s102
      %p104 = scmp.eq.s32.totalorder %s26, 0
      %p105 = por %p103, %p104
      %s106 = ssub.s32 %s20, %s27
      %p107 = scmp.eq.s32.totalorder %s106, 0
      %s109 = sadd.s32 %s108, 1
      %s110 = scalar_select %p107, %s108, %s109
      %p113 = pneg %p107
      %p114 = scmp.eq.s32.totalorder %s20, 1
      %p115 = por %p113, %p114
      %p116 = scmp.ne.s32.totalorder %s108, %s111
      %p117 = scmp.eq.s32.totalorder %s20, 0
      %p118 = por %p116, %p117
      %p119 = scmp.ne.s32.totalorder %s108, %s111
      %p120 = scmp.eq.s32.totalorder %s25, 1
      %p121 = por %p119, %p120
      %p122 = scmp.ne.s32.totalorder %s111, %s112
      %p123 = scmp.eq.s32.totalorder %s25, 0
      %p124 = por %p122, %p123
      %p125 = scmp.ne.s32.totalorder %s111, %s112
      %p126 = scmp.eq.s32.totalorder %s26, 1
      %p127 = por %p125, %p126
      %p129 = scmp.ne.s32.totalorder %s112, %s128
      %p130 = scmp.eq.s32.totalorder %s26, 0
      %p131 = por %p129, %p130
      %s132 = ssub.s32 %s20, %s27
      %p133 = scmp.eq.s32.totalorder %s132, 0
      %s135 = sadd.s32 %s134, 1
      %s136 = scalar_select %p133, %s134, %s135
      %p139 = pneg %p133
      %p140 = scmp.eq.s32.totalorder %s20, 1
      %p141 = por %p139, %p140
      %p142 = scmp.ne.s32.totalorder %s134, %s137
      %p143 = scmp.eq.s32.totalorder %s20, 0
      %p144 = por %p142, %p143
      %p145 = scmp.ne.s32.totalorder %s134, %s137
      %p146 = scmp.eq.s32.totalorder %s25, 1
      %p147 = por %p145, %p146
      %p148 = scmp.ne.s32.totalorder %s137, %s138
      %p149 = scmp.eq.s32.totalorder %s25, 0
      %p150 = por %p148, %p149
      %p151 = scmp.ne.s32.totalorder %s137, %s138
      %p152 = scmp.eq.s32.totalorder %s26, 1
      %p153 = por %p151, %p152
      %p155 = scmp.ne.s32.totalorder %s138, %s154
      %p156 = scmp.eq.s32.totalorder %s26, 0
      %p157 = por %p155, %p156
      %s159 = sadd.s32 %s158, 1
      %p162 = scmp.eq.s32.totalorder %s20, 1
      %p163 = scmp.ne.s32.totalorder %s158, %s160
      %p164 = scmp.eq.s32.totalorder %s20, 0
      %p165 = por %p163, %p164
      %p166 = scmp.ne.s32.totalorder %s158, %s160
      %p167 = scmp.eq.s32.totalorder %s25, 1
      %p168 = por %p166, %p167
      %p169 = scmp.ne.s32.totalorder %s160, %s161
      %p170 = scmp.eq.s32.totalorder %s25, 0
      %p171 = por %p169, %p170
      %p172 = scmp.ne.s32.totalorder %s160, %s161
      %p173 = scmp.eq.s32.totalorder %s26, 1
      %p174 = por %p172, %p173
      %p176 = scmp.ne.s32.totalorder %s161, %s175
      %p177 = scmp.eq.s32.totalorder %s26, 0
      %p178 = por %p176, %p177
      %s180 = sadd.s32 %s179, 1
      %p183 = scmp.eq.s32.totalorder %s20, 1
      %p184 = scmp.ne.s32.totalorder %s179, %s181
      %p185 = scmp.eq.s32.totalorder %s20, 0
      %p186 = por %p184, %p185
      %p187 = scmp.ne.s32.totalorder %s179, %s181
      %p188 = scmp.eq.s32.totalorder %s25, 1
      %p189 = por %p187, %p188
      %p190 = scmp.ne.s32.totalorder %s181, %s182
      %p191 = scmp.eq.s32.totalorder %s25, 0
      %p192 = por %p190, %p191
      %p193 = scmp.ne.s32.totalorder %s181, %s182
      %p194 = scmp.eq.s32.totalorder %s26, 1
      %p195 = por %p193, %p194
      %p197 = scmp.ne.s32.totalorder %s182, %s196
      %p198 = scmp.eq.s32.totalorder %s26, 0
      %p199 = por %p197, %p198
      %s201 = sadd.s32 %s200, 1
      %p204 = scmp.eq.s32.totalorder %s20, 1
      %p205 = scmp.ne.s32.totalorder %s200, %s202
      %p206 = scmp.eq.s32.totalorder %s20, 0
      %p207 = por %p205, %p206
      %p208 = scmp.ne.s32.totalorder %s200, %s202
      %p209 = scmp.eq.s32.totalorder %s25, 1
      %p210 = por %p208, %p209
      %p211 = scmp.ne.s32.totalorder %s202, %s203
      %p212 = scmp.eq.s32.totalorder %s25, 0
      %p213 = por %p211, %p212
      %p214 = scmp.ne.s32.totalorder %s202, %s203
      %p215 = scmp.eq.s32.totalorder %s26, 1
      %p216 = por %p214, %p215
      %p218 = scmp.ne.s32.totalorder %s203, %s217
      %p219 = scmp.eq.s32.totalorder %s26, 0
      %p220 = por %p218, %p219
      %s222 = sadd.s32 %s221, 1
      %p225 = scmp.eq.s32.totalorder %s20, 1
      %p226 = scmp.ne.s32.totalorder %s221, %s223
      %p227 = scmp.eq.s32.totalorder %s20, 0
      %p228 = por %p226, %p227
      %p229 = scmp.ne.s32.totalorder %s221, %s223
      %p230 = scmp.eq.s32.totalorder %s25, 1
      %p231 = por %p229, %p230
      %p232 = scmp.ne.s32.totalorder %s223, %s224
      %p233 = scmp.eq.s32.totalorder %s25, 0
      %p234 = por %p232, %p233
      %p235 = scmp.ne.s32.totalorder %s223, %s224
      %p236 = scmp.eq.s32.totalorder %s26, 1
      %p237 = por %p235, %p236
      %p239 = scmp.ne.s32.totalorder %s224, %s238
      %p240 = scmp.eq.s32.totalorder %s26, 0
      %p241 = por %p239, %p240
      %s243 = sadd.s32 %s242, 1
      %p246 = scmp.eq.s32.totalorder %s20, 1
      %p247 = scmp.ne.s32.totalorder %s242, %s244
      %p248 = scmp.eq.s32.totalorder %s20, 0
      %p249 = por %p247, %p248
      %p250 = scmp.ne.s32.totalorder %s242, %s244
      %p251 = scmp.eq.s32.totalorder %s25, 1
      %p252 = por %p250, %p251
      %p253 = scmp.ne.s32.totalorder %s244, %s245
      %p254 = scmp.eq.s32.totalorder %s25, 0
      %p255 = por %p253, %p254
      %p256 = scmp.ne.s32.totalorder %s244, %s245
      %p257 = scmp.eq.s32.totalorder %s26, 1
      %p258 = por %p256, %p257
      %p260 = scmp.ne.s32.totalorder %s245, %s259
      %p261 = scmp.eq.s32.totalorder %s26, 0
      %p262 = por %p260, %p261
      %s264 = sadd.s32 %s263, 1
      %p267 = scmp.eq.s32.totalorder %s20, 1
      %p268 = scmp.ne.s32.totalorder %s263, %s265
      %p269 = scmp.eq.s32.totalorder %s20, 0
      %p270 = por %p268, %p269
      %p271 = scmp.ne.s32.totalorder %s263, %s265
      %p272 = scmp.eq.s32.totalorder %s25, 1
      %p273 = por %p271, %p272
      %p274 = scmp.ne.s32.totalorder %s265, %s266
      %p275 = scmp.eq.s32.totalorder %s25, 0
      %p276 = por %p274, %p275
      %p277 = scmp.ne.s32.totalorder %s265, %s266
      %p278 = scmp.eq.s32.totalorder %s26, 1
      %p279 = por %p277, %p278
      %p281 = scmp.ne.s32.totalorder %s266, %s280
      %p282 = scmp.eq.s32.totalorder %s26, 0
      %p283 = por %p281, %p282
      %s284 = ssub.s32 %s20, %s27
      %p285 = scmp.eq.s32.totalorder %s284, 0
      %s287 = sadd.s32 %s286, 1
      %s288 = scalar_select %p285, %s286, %s287
      %p291 = pneg %p285
      %p292 = scmp.eq.s32.totalorder %s20, 1
      %p293 = por %p291, %p292
      %p294 = scmp.ne.s32.totalorder %s286, %s289
      %p295 = scmp.eq.s32.totalorder %s20, 0
      %p296 = por %p294, %p295
      %p297 = scmp.ne.s32.totalorder %s286, %s289
      %p298 = scmp.eq.s32.totalorder %s25, 1
      %p299 = por %p297, %p298
      %p300 = scmp.ne.s32.totalorder %s289, %s290
      %p301 = scmp.eq.s32.totalorder %s25, 0
      %p302 = por %p300, %p301
      %p303 = scmp.ne.s32.totalorder %s289, %s290
      %p304 = scmp.eq.s32.totalorder %s26, 1
      %p305 = por %p303, %p304
      %p307 = scmp.ne.s32.totalorder %s290, %s306
      %p308 = scmp.eq.s32.totalorder %s26, 0
      %p309 = por %p307, %p308
      %p310 = scmp.le.s32.totalorder 1, %s20
      %p311 = scmp.lt.s32.totalorder %s20, 3
      %p312 = pnand %p310, %p311
      %p313 = pneg %p312
      // Predicated region
      $region9: #{mix_attention2_forward.1} parent=5 // pred_check
        _
      $region10: #{mix_attention2_forward.1} parent=5 // pred_check_branch
        %315 = sbr.rel (%p312) target = $region12
      $region11: #{mix_attention2_forward.1} parent=5 // pred_region
        %s316 = ssub.s32 %s20, 1
        // Predicated region
        $region13: #{mix_attention2_forward.1} parent=11 // pred_check
          %p317 = pneg %p171
        $region14: #{mix_attention2_forward.1} parent=11 // pred_check_branch
          %319 = sbr.rel (%p317) target = $region16
        $region15: #{mix_attention2_forward.1} parent=11 // pred_region
          _
        $region16: #{mix_attention2_forward.1} parent=11 // pred_fallthru
          _
        // Predicated region
        $region17: #{mix_attention2_forward.1} parent=11 // pred_check
          %p320 = pneg %p192
        $region18: #{mix_attention2_forward.1} parent=11 // pred_check_branch
          %322 = sbr.rel (%p320) target = $region20
        $region19: #{mix_attention2_forward.1} parent=11 // pred_region
          _
        $region20: #{mix_attention2_forward.1} parent=11 // pred_fallthru
          _
        // Predicated region
        $region21: #{mix_attention2_forward.1} parent=11 // pred_check
          %p323 = pneg %p213
        $region22: #{mix_attention2_forward.1} parent=11 // pred_check_branch
          %325 = sbr.rel (%p323) target = $region24
        $region23: #{mix_attention2_forward.1} parent=11 // pred_region
          _
        $region24: #{mix_attention2_forward.1} parent=11 // pred_fallthru
          _
        // Predicated region
        $region25: #{mix_attention2_forward.1} parent=11 // pred_check
          %p326 = pneg %p234
        $region26: #{mix_attention2_forward.1} parent=11 // pred_check_branch
          %328 = sbr.rel (%p326) target = $region28
        $region27: #{mix_attention2_forward.1} parent=11 // pred_region
          _
        $region28: #{mix_attention2_forward.1} parent=11 // pred_fallthru
          _
        // Predicated region
        $region29: #{mix_attention2_forward.1} parent=11 // pred_check
          %p329 = pneg %p255
        $region30: #{mix_attention2_forward.1} parent=11 // pred_check_branch
          %331 = sbr.rel (%p329) target = $region32
        $region31: #{mix_attention2_forward.1} parent=11 // pred_region
          _
        $region32: #{mix_attention2_forward.1} parent=11 // pred_fallthru
          _
        // Predicated region
        $region33: #{mix_attention2_forward.1} parent=11 // pred_check
          %p332 = pneg %p276
        $region34: #{mix_attention2_forward.1} parent=11 // pred_check_branch
          %334 = sbr.rel (%p332) target = $region36
        $region35: #{mix_attention2_forward.1} parent=11 // pred_region
          _
        $region36: #{mix_attention2_forward.1} parent=11 // pred_fallthru
          _
      $region12: #{mix_attention2_forward.1} parent=5 // pred_fallthru
        _
      %p335 = scmp.lt.s32.totalorder %s20, 2
      // Predicated region
      $region37: #{mix_attention2_forward.1} parent=5 // pred_check
        %p336 = pneg %p335
      $region38: #{mix_attention2_forward.1} parent=5 // pred_check_branch
        %338 = sbr.rel (%p336) target = $region40
      $region39: #{mix_attention2_forward.1} parent=5 // pred_region
        // Predicated region
        $region41: #{mix_attention2_forward.1} parent=39 // pred_check
          %p339 = pneg %p40
        $region42: #{mix_attention2_forward.1} parent=39 // pred_check_branch
          %341 = sbr.rel (%p339) target = $region44
        $region43: #{mix_attention2_forward.1} parent=39 // pred_region
          %p342 = scmp.lt.s32.totalorder %s20, 1
          %s343 = scalar_select %p342, %s20, 1
          %s344 = smul.addr %s343, 8
          %s345 = scalar_lea.vmem %s0, %s344
        $region44: #{mix_attention2_forward.1} parent=39 // pred_fallthru
          _
        // Predicated region
        $region45: #{mix_attention2_forward.1} parent=39 // pred_check
          %p346 = pneg %p66
        $region46: #{mix_attention2_forward.1} parent=39 // pred_check_branch
          %348 = sbr.rel (%p346) target = $region48
        $region47: #{mix_attention2_forward.1} parent=39 // pred_region
          %p349 = scmp.lt.s32.totalorder %s20, 1
          %s350 = scalar_select %p349, %s20, 1
          %s351 = smul.addr %s350, 4
          %s352 = scalar_lea.vmem %s1, %s351
        $region48: #{mix_attention2_forward.1} parent=39 // pred_fallthru
          _
        // Predicated region
        $region49: #{mix_attention2_forward.1} parent=39 // pred_check
          %p353 = pneg %p92
        $region50: #{mix_attention2_forward.1} parent=39 // pred_check_branch
          %355 = sbr.rel (%p353) target = $region52
        $region51: #{mix_attention2_forward.1} parent=39 // pred_region
          %p356 = scmp.lt.s32.totalorder %s20, 1
          %s357 = scalar_select %p356, %s20, 1
          %s358 = smul.addr %s357, 4
          %s359 = scalar_lea.vmem %s2, %s358
        $region52: #{mix_attention2_forward.1} parent=39 // pred_fallthru
          _
        // Predicated region
        $region53: #{mix_attention2_forward.1} parent=39 // pred_check
          %p360 = pneg %p118
        $region54: #{mix_attention2_forward.1} parent=39 // pred_check_branch
          %362 = sbr.rel (%p360) target = $region56
        $region55: #{mix_attention2_forward.1} parent=39 // pred_region
          %p363 = scmp.lt.s32.totalorder %s20, 1
          %s364 = scalar_select %p363, %s20, 1
          %s365 = smul.addr %s364, 4
          %s366 = scalar_lea.vmem %s3, %s365
        $region56: #{mix_attention2_forward.1} parent=39 // pred_fallthru
          _
        // Predicated region
        $region57: #{mix_attention2_forward.1} parent=39 // pred_check
          %p367 = pneg %p144
        $region58: #{mix_attention2_forward.1} parent=39 // pred_check_branch
          %369 = sbr.rel (%p367) target = $region60
        $region59: #{mix_attention2_forward.1} parent=39 // pred_region
          %p370 = scmp.lt.s32.totalorder %s20, 1
          %s371 = scalar_select %p370, %s20, 1
          %s372 = smul.addr %s371, 4
          %s373 = scalar_lea.vmem %s4, %s372
        $region60: #{mix_attention2_forward.1} parent=39 // pred_fallthru
          _
      $region40: #{mix_attention2_forward.1} parent=5 // pred_fallthru
        _
      %p374 = scmp.le.s32.totalorder 1, %s20
      %p375 = scmp.lt.s32.totalorder %s20, 3
      %p376 = pnand %p374, %p375
      %p377 = pneg %p376
      // Predicated region
      $region61: #{mix_attention2_forward.1} parent=5 // pred_check
        _
      $region62: #{mix_attention2_forward.1} parent=5 // pred_check_branch
        %379 = sbr.rel (%p376) target = $region64
      $region63: #{mix_attention2_forward.1} parent=5 // pred_region
        %s380 = ssub.s32 %s20, 1
        %p381 = scmp.lt.s32.totalorder %s25, 1
        %s382 = scalar_select %p381, %s25, 1
        %s383 = smul.addr %s382, 8
        %s384 = scalar_lea.vmem %s0, %s383
        %p385 = pneg %p46
        %p386 = pneg %p43
        %p387 = scmp.lt.s32.totalorder %s25, 1
        %s388 = scalar_select %p387, %s25, 1
        %s389 = smul.addr %s388, 4
        %s390 = scalar_lea.vmem %s1, %s389
        %p391 = pneg %p72
        %p392 = pneg %p69
        %p393 = scmp.lt.s32.totalorder %s25, 1
        %s394 = scalar_select %p393, %s25, 1
        %s395 = smul.addr %s394, 4
        %s396 = scalar_lea.vmem %s2, %s395
        %p397 = pneg %p98
        %p398 = pneg %p95
        %p399 = scmp.lt.s32.totalorder %s25, 1
        %s400 = scalar_select %p399, %s25, 1
        %s401 = smul.addr %s400, 4
        %s402 = scalar_lea.vmem %s3, %s401
        %p403 = pneg %p124
        %p404 = pneg %p121
        %p405 = scmp.lt.s32.totalorder %s25, 1
        %s406 = scalar_select %p405, %s25, 1
        %s407 = smul.addr %s406, 4
        %s408 = scalar_lea.vmem %s4, %s407
        %p409 = pneg %p150
        %p410 = pneg %p147
        %p411 = pneg %p171
        %p412 = pneg %p168
        %p413 = pneg %p192
        %p414 = pneg %p189
        %p415 = pneg %p213
        %p416 = pneg %p210
        %p417 = pneg %p234
        %p418 = pneg %p231
        %p419 = pneg %p255
        %p420 = pneg %p252
        %p421 = pneg %p276
        %p422 = pneg %p273
        %p423 = pneg %p302
        %p424 = pneg %p299
        %s425 = sand.u32 %s289, 1
        %s426 = scalar_lea.sflag [#allocation3], %s425
        %s427 = sand.u32 %s289, 1
        %s428 = smul.addr %s427, 8
        %s429 = scalar_lea.vmem [#allocation2], %s428
        %p430 = scmp.lt.s32.totalorder %s25, 1
        %s431 = scalar_select %p430, %s25, 1
        %s432 = smul.addr %s431, 8
        %s433 = scalar_lea.vmem %s0, %s432
        %p434 = scmp.lt.s32.totalorder %s25, 1
        %s435 = scalar_select %p434, %s25, 1
        %s436 = smul.addr %s435, 4
        %s437 = scalar_lea.vmem %s1, %s436
        %p438 = scmp.lt.s32.totalorder %s25, 1
        %s439 = scalar_select %p438, %s25, 1
        %s440 = smul.addr %s439, 4
        %s441 = scalar_lea.vmem %s2, %s440
        %p442 = scmp.lt.s32.totalorder %s25, 1
        %s443 = scalar_select %p442, %s25, 1
        %s444 = smul.addr %s443, 4
        %s445 = scalar_lea.vmem %s3, %s444
        %p446 = scmp.lt.s32.totalorder %s25, 1
        %s447 = scalar_select %p446, %s25, 1
        %s448 = smul.addr %s447, 4
        %s449 = scalar_lea.vmem %s4, %s448
        %v451 = vld [vmem:[%s433] sm:$0xff]
        %v452 = vld [vmem:[%s437] sm:$0xf]
        %v453 = vld [vmem:[%s441] sm:$0xf]
        %v454 = vld [vmem:[%s445] sm:$0xf]
        %v455 = vld [vmem:[%s449] sm:$0xf]
        %v456 = vpack.c.bf16 %v451, %v451
        %v457 = vld [vmem:[%s5] sm:$0xf]
        %v458 = vld [vmem:[%s5 + $0x4] sm:$0xf]
        %v459 = vld [vmem:[%s5 + $0x8] sm:$0xf]
        %v460 = vld [vmem:[%s5 + $0xc] sm:$0xf]
        %v461 = vld [vmem:[%s6] sm:$0x1]
        %v463 = vlaneseq
        %v464 = vshrl.u32 %v463, 7
        %v465 = vsub.s32 0, %v464
        %v466 = vrot.slane %v461, %v465
        %v472 = vunpack.c.l.b16 %v457
        %v473 = vunpack.c.l.b16 %v458
        %v474 = vunpack.c.l.b16 %v459
        %v475 = vunpack.c.l.b16 %v460
        %v476 = vpack.c.b16 %v473, %v472
        %v477 = vpack.c.b16 %v475, %v474
        %vm480 = vcmask 261120
        %v482 = vsel %vm480, %v456, 0
        %484 = vmatprep.subr.bf16.mxu0 0
        %485 = vmatpush1.bf16.msra.mxu0 %v476
        %486 = vmatprep.subr.bf16.mxu0 0
        %487 = vmatpush1.bf16.msra.mxu0 %v477
        %488 = vmatprep.subr.bf16.mxu0 0
        %489 = vmatpush1.bf16.msra.mxu0 0
        %490 = vmatprep.subr.bf16.mxu0 0
        %491 = vmatpush1.bf16.msra.mxu0 0
        %492 = vmatprep.subr.bf16.mxu0 0
        %493 = vmatpush1.bf16.msra.mxu0 0
        %494 = vmatprep.subr.bf16.mxu0 0
        %495 = vmatpush1.bf16.msra.mxu0 0
        %496 = vmatprep.subr.bf16.mxu0 0
        %497 = vmatpush1.bf16.msra.mxu0 0
        %498 = vmatprep.subr.bf16.mxu0 0
        %499 = vmatpush1.bf16.msra.mxu0 0
        %500 = vmatprep.subr.bf16.mxu0 0
        %501 = vmatpush1.bf16.msra.mxu0 0
        %502 = vmatprep.subr.bf16.mxu0 0
        %503 = vmatpush1.bf16.msra.mxu0 0
        %504 = vmatprep.subr.bf16.mxu0 0
        %505 = vmatpush1.bf16.msra.mxu0 0
        %506 = vmatprep.subr.bf16.mxu0 0
        %507 = vmatpush1.bf16.msra.mxu0 0
        %508 = vmatprep.subr.bf16.mxu0 0
        %509 = vmatpush1.bf16.msra.mxu0 0
        %510 = vmatprep.subr.bf16.mxu0 0
        %511 = vmatpush1.bf16.msra.mxu0 0
        %512 = vmatprep.subr.bf16.mxu0 0
        %513 = vmatpush1.bf16.msra.mxu0 0
        %514 = vmatprep.subr.bf16.mxu0 0
        %515 = vmatpush1.bf16.msra.mxu0 0
        %516 = vmatprep.mubr.bf16.mxu0 0
        %517 = vmatmul.mubr.bf16.gmra.mrb[0].mxu0 %v482
        %v518 = vpop.f32.mrb[0].mxu0
        %v519 = vadd.f32 %v466, %v518
        %v520 = vpop.f32.mrb[0].mxu0
        %v521 = vpop.f32.mrb[0].mxu0
        %v522 = vpop.f32.mrb[0].mxu0
        %523 = vdwg.mxu0
        %s524 = scalar_lea.vmem %s5, 16
        %v525 = vld [vmem:[%s524] sm:$0xf]
        %v526 = vld [vmem:[%s524 + $0x4] sm:$0xf]
        %v527 = vld [vmem:[%s524 + $0x8] sm:$0xf]
        %v528 = vld [vmem:[%s524 + $0xc] sm:$0xf]
        %s529 = scalar_lea.vmem %s6, 1
        %v530 = vld [vmem:[%s529] sm:$0x1]
        %v532 = vlaneseq
        %v533 = vshrl.u32 %v532, 7
        %v534 = vsub.s32 0, %v533
        %v535 = vrot.slane %v530, %v534
        %v541 = vunpack.c.l.b16 %v525
        %v542 = vunpack.c.l.b16 %v526
        %v543 = vunpack.c.l.b16 %v527
        %v544 = vunpack.c.l.b16 %v528
        %v545 = vpack.c.b16 %v542, %v541
        %v546 = vpack.c.b16 %v544, %v543
        %v550 = vsel %vm480, %v452, 0
        %552 = vmatprep.subr.bf16.mxu0 0
        %553 = vmatpush1.bf16.msra.mxu0 %v545
        %554 = vmatprep.subr.bf16.mxu0 0
        %555 = vmatpush1.bf16.msra.mxu0 %v546
        %556 = vmatprep.subr.bf16.mxu0 0
        %557 = vmatpush1.bf16.msra.mxu0 0
        %558 = vmatprep.subr.bf16.mxu0 0
        %559 = vmatpush1.bf16.msra.mxu0 0
        %560 = vmatprep.subr.bf16.mxu0 0
        %561 = vmatpush1.bf16.msra.mxu0 0
        %562 = vmatprep.subr.bf16.mxu0 0
        %563 = vmatpush1.bf16.msra.mxu0 0
        %564 = vmatprep.subr.bf16.mxu0 0
        %565 = vmatpush1.bf16.msra.mxu0 0
        %566 = vmatprep.subr.bf16.mxu0 0
        %567 = vmatpush1.bf16.msra.mxu0 0
        %568 = vmatprep.subr.bf16.mxu0 0
        %569 = vmatpush1.bf16.msra.mxu0 0
        %570 = vmatprep.subr.bf16.mxu0 0
        %571 = vmatpush1.bf16.msra.mxu0 0
        %572 = vmatprep.subr.bf16.mxu0 0
        %573 = vmatpush1.bf16.msra.mxu0 0
        %574 = vmatprep.subr.bf16.mxu0 0
        %575 = vmatpush1.bf16.msra.mxu0 0
        %576 = vmatprep.subr.bf16.mxu0 0
        %577 = vmatpush1.bf16.msra.mxu0 0
        %578 = vmatprep.subr.bf16.mxu0 0
        %579 = vmatpush1.bf16.msra.mxu0 0
        %580 = vmatprep.subr.bf16.mxu0 0
        %581 = vmatpush1.bf16.msra.mxu0 0
        %582 = vmatprep.subr.bf16.mxu0 0
        %583 = vmatpush1.bf16.msra.mxu0 0
        %584 = vmatprep.mubr.bf16.mxu0 0
        %585 = vmatmul.mubr.bf16.gmra.mrb[0].mxu0 %v550
        %v586 = vpop.f32.mrb[0].mxu0
        %v587 = vadd.f32 %v535, %v586
        %v588 = vpop.f32.mrb[0].mxu0
        %v589 = vpop.f32.mrb[0].mxu0
        %v590 = vpop.f32.mrb[0].mxu0
        %591 = vdwg.mxu0
        %s592 = scalar_lea.vmem %s5, 32
        %v593 = vld [vmem:[%s592] sm:$0xf]
        %v594 = vld [vmem:[%s592 + $0x4] sm:$0xf]
        %v595 = vld [vmem:[%s592 + $0x8] sm:$0xf]
        %v596 = vld [vmem:[%s592 + $0xc] sm:$0xf]
        %s597 = scalar_lea.vmem %s6, 2
        %v598 = vld [vmem:[%s597] sm:$0x1]
        %v600 = vlaneseq
        %v601 = vshrl.u32 %v600, 7
        %v602 = vsub.s32 0, %v601
        %v603 = vrot.slane %v598, %v602
        %v609 = vunpack.c.l.b16 %v593
        %v610 = vunpack.c.l.b16 %v594
        %v611 = vunpack.c.l.b16 %v595
        %v612 = vunpack.c.l.b16 %v596
        %v613 = vpack.c.b16 %v610, %v609
        %v614 = vpack.c.b16 %v612, %v611
        %v618 = vsel %vm480, %v453, 0
        %620 = vmatprep.subr.bf16.mxu0 0
        %621 = vmatpush1.bf16.msra.mxu0 %v613
        %622 = vmatprep.subr.bf16.mxu0 0
        %623 = vmatpush1.bf16.msra.mxu0 %v614
        %624 = vmatprep.subr.bf16.mxu0 0
        %625 = vmatpush1.bf16.msra.mxu0 0
        %626 = vmatprep.subr.bf16.mxu0 0
        %627 = vmatpush1.bf16.msra.mxu0 0
        %628 = vmatprep.subr.bf16.mxu0 0
        %629 = vmatpush1.bf16.msra.mxu0 0
        %630 = vmatprep.subr.bf16.mxu0 0
        %631 = vmatpush1.bf16.msra.mxu0 0
        %632 = vmatprep.subr.bf16.mxu0 0
        %633 = vmatpush1.bf16.msra.mxu0 0
        %634 = vmatprep.subr.bf16.mxu0 0
        %635 = vmatpush1.bf16.msra.mxu0 0
        %636 = vmatprep.subr.bf16.mxu0 0
        %637 = vmatpush1.bf16.msra.mxu0 0
        %638 = vmatprep.subr.bf16.mxu0 0
        %639 = vmatpush1.bf16.msra.mxu0 0
        %640 = vmatprep.subr.bf16.mxu0 0
        %641 = vmatpush1.bf16.msra.mxu0 0
        %642 = vmatprep.subr.bf16.mxu0 0
        %643 = vmatpush1.bf16.msra.mxu0 0
        %644 = vmatprep.subr.bf16.mxu0 0
        %645 = vmatpush1.bf16.msra.mxu0 0
        %646 = vmatprep.subr.bf16.mxu0 0
        %647 = vmatpush1.bf16.msra.mxu0 0
        %648 = vmatprep.subr.bf16.mxu0 0
        %649 = vmatpush1.bf16.msra.mxu0 0
        %650 = vmatprep.subr.bf16.mxu0 0
        %651 = vmatpush1.bf16.msra.mxu0 0
        %652 = vmatprep.mubr.bf16.mxu0 0
        %653 = vmatmul.mubr.bf16.gmra.mrb[0].mxu0 %v618
        %v654 = vpop.f32.mrb[0].mxu0
        %v655 = vadd.f32 %v603, %v654
        %v656 = vpop.f32.mrb[0].mxu0
        %v657 = vpop.f32.mrb[0].mxu0
        %v658 = vpop.f32.mrb[0].mxu0
        %659 = vdwg.mxu0
        %s660 = scalar_lea.vmem %s5, 48
        %v661 = vld [vmem:[%s660] sm:$0xf]
        %v662 = vld [vmem:[%s660 + $0x4] sm:$0xf]
        %v663 = vld [vmem:[%s660 + $0x8] sm:$0xf]
        %v664 = vld [vmem:[%s660 + $0xc] sm:$0xf]
        %s665 = scalar_lea.vmem %s6, 3
        %v666 = vld [vmem:[%s665] sm:$0x1]
        %v668 = vlaneseq
        %v669 = vshrl.u32 %v668, 7
        %v670 = vsub.s32 0, %v669
        %v671 = vrot.slane %v666, %v670
        %v677 = vunpack.c.l.b16 %v661
        %v678 = vunpack.c.l.b16 %v662
        %v679 = vunpack.c.l.b16 %v663
        %v680 = vunpack.c.l.b16 %v664
        %v681 = vpack.c.b16 %v678, %v677
        %v682 = vpack.c.b16 %v680, %v679
        %v686 = vsel %vm480, %v454, 0
        %688 = vmatprep.subr.bf16.mxu0 0
        %689 = vmatpush1.bf16.msra.mxu0 %v681
        %690 = vmatprep.subr.bf16.mxu0 0
        %691 = vmatpush1.bf16.msra.mxu0 %v682
        %692 = vmatprep.subr.bf16.mxu0 0
        %693 = vmatpush1.bf16.msra.mxu0 0
        %694 = vmatprep.subr.bf16.mxu0 0
        %695 = vmatpush1.bf16.msra.mxu0 0
        %696 = vmatprep.subr.bf16.mxu0 0
        %697 = vmatpush1.bf16.msra.mxu0 0
        %698 = vmatprep.subr.bf16.mxu0 0
        %699 = vmatpush1.bf16.msra.mxu0 0
        %700 = vmatprep.subr.bf16.mxu0 0
        %701 = vmatpush1.bf16.msra.mxu0 0
        %702 = vmatprep.subr.bf16.mxu0 0
        %703 = vmatpush1.bf16.msra.mxu0 0
        %704 = vmatprep.subr.bf16.mxu0 0
        %705 = vmatpush1.bf16.msra.mxu0 0
        %706 = vmatprep.subr.bf16.mxu0 0
        %707 = vmatpush1.bf16.msra.mxu0 0
        %708 = vmatprep.subr.bf16.mxu0 0
        %709 = vmatpush1.bf16.msra.mxu0 0
        %710 = vmatprep.subr.bf16.mxu0 0
        %711 = vmatpush1.bf16.msra.mxu0 0
        %712 = vmatprep.subr.bf16.mxu0 0
        %713 = vmatpush1.bf16.msra.mxu0 0
        %714 = vmatprep.subr.bf16.mxu0 0
        %715 = vmatpush1.bf16.msra.mxu0 0
        %716 = vmatprep.subr.bf16.mxu0 0
        %717 = vmatpush1.bf16.msra.mxu0 0
        %718 = vmatprep.subr.bf16.mxu0 0
        %719 = vmatpush1.bf16.msra.mxu0 0
        %720 = vmatprep.mubr.bf16.mxu0 0
        %721 = vmatmul.mubr.bf16.gmra.mrb[0].mxu0 %v686
        %v722 = vpop.f32.mrb[0].mxu0
        %v723 = vadd.f32 %v671, %v722
        %v724 = vpop.f32.mrb[0].mxu0
        %v725 = vpop.f32.mrb[0].mxu0
        %v726 = vpop.f32.mrb[0].mxu0
        %727 = vdwg.mxu0
        %s728 = scalar_lea.vmem %s5, 64
        %v729 = vld [vmem:[%s728] sm:$0xf]
        %v730 = vld [vmem:[%s728 + $0x4] sm:$0xf]
        %v731 = vld [vmem:[%s728 + $0x8] sm:$0xf]
        %v732 = vld [vmem:[%s728 + $0xc] sm:$0xf]
        %s733 = scalar_lea.vmem %s6, 4
        %v734 = vld [vmem:[%s733] sm:$0x1]
        %v736 = vlaneseq
        %v737 = vshrl.u32 %v736, 7
        %v738 = vsub.s32 0, %v737
        %v739 = vrot.slane %v734, %v738
        %v745 = vunpack.c.l.b16 %v729
        %v746 = vunpack.c.l.b16 %v730
        %v747 = vunpack.c.l.b16 %v731
        %v748 = vunpack.c.l.b16 %v732
        %v749 = vpack.c.b16 %v746, %v745
        %v750 = vpack.c.b16 %v748, %v747
        %v754 = vsel %vm480, %v455, 0
        %756 = vmatprep.subr.bf16.mxu0 0
        %757 = vmatpush1.bf16.msra.mxu0 %v749
        %758 = vmatprep.subr.bf16.mxu0 0
        %759 = vmatpush1.bf16.msra.mxu0 %v750
        %760 = vmatprep.subr.bf16.mxu0 0
        %761 = vmatpush1.bf16.msra.mxu0 0
        %762 = vmatprep.subr.bf16.mxu0 0
        %763 = vmatpush1.bf16.msra.mxu0 0
        %764 = vmatprep.subr.bf16.mxu0 0
        %765 = vmatpush1.bf16.msra.mxu0 0
        %766 = vmatprep.subr.bf16.mxu0 0
        %767 = vmatpush1.bf16.msra.mxu0 0
        %768 = vmatprep.subr.bf16.mxu0 0
        %769 = vmatpush1.bf16.msra.mxu0 0
        %770 = vmatprep.subr.bf16.mxu0 0
        %771 = vmatpush1.bf16.msra.mxu0 0
        %772 = vmatprep.subr.bf16.mxu0 0
        %773 = vmatpush1.bf16.msra.mxu0 0
        %774 = vmatprep.subr.bf16.mxu0 0
        %775 = vmatpush1.bf16.msra.mxu0 0
        %776 = vmatprep.subr.bf16.mxu0 0
        %777 = vmatpush1.bf16.msra.mxu0 0
        %778 = vmatprep.subr.bf16.mxu0 0
        %779 = vmatpush1.bf16.msra.mxu0 0
        %780 = vmatprep.subr.bf16.mxu0 0
        %781 = vmatpush1.bf16.msra.mxu0 0
        %782 = vmatprep.subr.bf16.mxu0 0
        %783 = vmatpush1.bf16.msra.mxu0 0
        %784 = vmatprep.subr.bf16.mxu0 0
        %785 = vmatpush1.bf16.msra.mxu0 0
        %786 = vmatprep.subr.bf16.mxu0 0
        %787 = vmatpush1.bf16.msra.mxu0 0
        %788 = vmatprep.mubr.bf16.mxu0 0
        %789 = vmatmul.mubr.bf16.gmra.mrb[0].mxu0 %v754
        %v790 = vpop.f32.mrb[0].mxu0
        %v791 = vadd.f32 %v739, %v790
        %v792 = vpop.f32.mrb[0].mxu0
        %v793 = vpop.f32.mrb[0].mxu0
        %v794 = vpop.f32.mrb[0].mxu0
        %795 = vdwg.mxu0
        %797 = vrot.lane.b32.xlu0 %v519, 120
        %v798 = vpop.permute.xlu0 %797
        %800 = vrot.lane.b32.xlu0 %v519, 112
        %v801 = vpop.permute.xlu0 %800
        %803 = vrot.lane.b32.xlu0 %v519, 104
        %v804 = vpop.permute.xlu0 %803
        %v806 = vcombine.low %v519, %v801
        %v807 = vcombine.high %v519, %v801
        %v809 = vunpack.c.l.s4 1983009808
        %v810 = vunpack.c.0.s8 %v809
        %v811 = vlaneseq
        %v812 = vshrl.u32 %v811, 7
        %v813 = vsub.s32 %v810, %v812
        %v814 = vrot.slane %v806, %v813
        %v816 = vunpack.c.l.s4 1983009808
        %v817 = vunpack.c.0.s8 %v816
        %v818 = vlaneseq
        %v819 = vshrl.u32 %v818, 7
        %v820 = vsub.s32 %v817, %v819
        %v821 = vrot.slane %v807, %v820
        %v822 = vcombine.low %v798, %v804
        %v823 = vcombine.high %v798, %v804
        %v825 = vunpack.c.l.s4 1983009808
        %v826 = vunpack.c.0.s8 %v825
        %v827 = vlaneseq
        %v828 = vshrl.u32 %v827, 7
        %v829 = vsub.s32 %v826, %v828
        %v830 = vrot.slane %v822, %v829
        %v832 = vunpack.c.l.s4 1983009808
        %v833 = vunpack.c.0.s8 %v832
        %v834 = vlaneseq
        %v835 = vshrl.u32 %v834, 7
        %v836 = vsub.s32 %v833, %v835
        %v837 = vrot.slane %v823, %v836
        %v838 = vcombine.low %v814, %v830
        %v839 = vcombine.high %v814, %v830
        %v841 = vunpack.c.l.s4 1934713408
        %v842 = vunpack.c.0.s8 %v841
        %v843 = vlaneseq
        %v844 = vshrl.u32 %v843, 7
        %v845 = vsub.s32 %v842, %v844
        %v846 = vrot.slane %v838, %v845
        %v848 = vunpack.c.l.s4 1934713408
        %v849 = vunpack.c.0.s8 %v848
        %v850 = vlaneseq
        %v851 = vshrl.u32 %v850, 7
        %v852 = vsub.s32 %v849, %v851
        %v853 = vrot.slane %v839, %v852
        %v854 = vcombine.low %v821, %v837
        %v855 = vcombine.high %v821, %v837
        %v857 = vunpack.c.l.s4 1934713408
        %v858 = vunpack.c.0.s8 %v857
        %v859 = vlaneseq
        %v860 = vshrl.u32 %v859, 7
        %v861 = vsub.s32 %v858, %v860
        %v862 = vrot.slane %v854, %v861
        %v864 = vunpack.c.l.s4 1934713408
        %v865 = vunpack.c.0.s8 %v864
        %v866 = vlaneseq
        %v867 = vshrl.u32 %v866, 7
        %v868 = vsub.s32 %v865, %v867
        %v869 = vrot.slane %v855, %v868
        %v870 = vcombine.high %v846, 0.0
        %v871 = vcombine.high %v853, 0.0
        %v872 = vcombine.high %v862, 0.0
        %v873 = vcombine.high %v869, 0.0
        %v874 = vcombine.low %v846, %v853
        %v876 = vunpack.c.l.s4 1983009808
        %v877 = vunpack.c.0.s8 %v876
        %v878 = vlaneseq
        %v879 = vshrl.u32 %v878, 7
        %v880 = vsub.s32 %v877, %v879
        %v881 = vrot.slane %v874, %v880
        %v882 = vcombine.low %v870, %v871
        %v884 = vunpack.c.l.s4 1983009808
        %v885 = vunpack.c.0.s8 %v884
        %v886 = vlaneseq
        %v887 = vshrl.u32 %v886, 7
        %v888 = vsub.s32 %v885, %v887
        %v889 = vrot.slane %v882, %v888
        %v890 = vcombine.low %v862, %v869
        %v892 = vunpack.c.l.s4 1983009808
        %v893 = vunpack.c.0.s8 %v892
        %v894 = vlaneseq
        %v895 = vshrl.u32 %v894, 7
        %v896 = vsub.s32 %v893, %v895
        %v897 = vrot.slane %v890, %v896
        %v898 = vcombine.low %v872, %v873
        %v900 = vunpack.c.l.s4 1983009808
        %v901 = vunpack.c.0.s8 %v900
        %v902 = vlaneseq
        %v903 = vshrl.u32 %v902, 7
        %v904 = vsub.s32 %v901, %v903
        %v905 = vrot.slane %v898, %v904
        %v906 = vcombine.low %v881, %v889
        %v907 = vcombine.high %v881, %v889
        %v909 = vunpack.c.l.s4 1934713408
        %v910 = vunpack.c.0.s8 %v909
        %v911 = vlaneseq
        %v912 = vshrl.u32 %v911, 7
        %v913 = vsub.s32 %v910, %v912
        %v914 = vrot.slane %v906, %v913
        %v916 = vunpack.c.l.s4 1934713408
        %v917 = vunpack.c.0.s8 %v916
        %v918 = vlaneseq
        %v919 = vshrl.u32 %v918, 7
        %v920 = vsub.s32 %v917, %v919
        %v921 = vrot.slane %v907, %v920
        %v922 = vcombine.low %v897, %v905
        %v923 = vcombine.high %v897, %v905
        %v925 = vunpack.c.l.s4 1934713408
        %v926 = vunpack.c.0.s8 %v925
        %v927 = vlaneseq
        %v928 = vshrl.u32 %v927, 7
        %v929 = vsub.s32 %v926, %v928
        %v930 = vrot.slane %v922, %v929
        %v932 = vunpack.c.l.s4 1934713408
        %v933 = vunpack.c.0.s8 %v932
        %v934 = vlaneseq
        %v935 = vshrl.u32 %v934, 7
        %v936 = vsub.s32 %v933, %v935
        %v937 = vrot.slane %v923, %v936
        %v938 = vcombine.low %v914, %v930
        %v939 = vcombine.high %v914, %v930
        %v940 = vcombine.low %v921, %v937
        %v941 = vcombine.high %v921, %v937
        %v942 = vpack.c.bf16 %v938, %v938
        %v943 = vpack.c.bf16 %v939, %v939
        %v944 = vpack.c.bf16 %v940, %v940
        %v945 = vpack.c.bf16 %v941, %v941
        %947 = vrot.lane.b32.xlu0 %v587, 120
        %v948 = vpop.permute.xlu0 %947
        %950 = vrot.lane.b32.xlu0 %v587, 112
        %v951 = vpop.permute.xlu0 %950
        %953 = vrot.lane.b32.xlu0 %v587, 104
        %v954 = vpop.permute.xlu0 %953
        %v956 = vcombine.low %v587, %v951
        %v957 = vcombine.high %v587, %v951
        %v959 = vunpack.c.l.s4 1983009808
        %v960 = vunpack.c.0.s8 %v959
        %v961 = vlaneseq
        %v962 = vshrl.u32 %v961, 7
        %v963 = vsub.s32 %v960, %v962
        %v964 = vrot.slane %v956, %v963
        %v966 = vunpack.c.l.s4 1983009808
        %v967 = vunpack.c.0.s8 %v966
        %v968 = vlaneseq
        %v969 = vshrl.u32 %v968, 7
        %v970 = vsub.s32 %v967, %v969
        %v971 = vrot.slane %v957, %v970
        %v972 = vcombine.low %v948, %v954
        %v973 = vcombine.high %v948, %v954
        %v975 = vunpack.c.l.s4 1983009808
        %v976 = vunpack.c.0.s8 %v975
        %v977 = vlaneseq
        %v978 = vshrl.u32 %v977, 7
        %v979 = vsub.s32 %v976, %v978
        %v980 = vrot.slane %v972, %v979
        %v982 = vunpack.c.l.s4 1983009808
        %v983 = vunpack.c.0.s8 %v982
        %v984 = vlaneseq
        %v985 = vshrl.u32 %v984, 7
        %v986 = vsub.s32 %v983, %v985
        %v987 = vrot.slane %v973, %v986
        %v988 = vcombine.low %v964, %v980
        %v989 = vcombine.high %v964, %v980
        %v991 = vunpack.c.l.s4 1934713408
        %v992 = vunpack.c.0.s8 %v991
        %v993 = vlaneseq
        %v994 = vshrl.u32 %v993, 7
        %v995 = vsub.s32 %v992, %v994
        %v996 = vrot.slane %v988, %v995
        %v998 = vunpack.c.l.s4 1934713408
        %v999 = vunpack.c.0.s8 %v998
        %v1000 = vlaneseq
        %v1001 = vshrl.u32 %v1000, 7
        %v1002 = vsub.s32 %v999, %v1001
        %v1003 = vrot.slane %v989, %v1002
        %v1004 = vcombine.low %v971, %v987
        %v1005 = vcombine.high %v971, %v987
        %v1007 = vunpack.c.l.s4 1934713408
        %v1008 = vunpack.c.0.s8 %v1007
        %v1009 = vlaneseq
        %v1010 = vshrl.u32 %v1009, 7
        %v1011 = vsub.s32 %v1008, %v1010
        %v1012 = vrot.slane %v1004, %v1011
        %v1014 = vunpack.c.l.s4 1934713408
        %v1015 = vunpack.c.0.s8 %v1014
        %v1016 = vlaneseq
        %v1017 = vshrl.u32 %v1016, 7
        %v1018 = vsub.s32 %v1015, %v1017
        %v1019 = vrot.slane %v1005, %v1018
        %v1020 = vcombine.high %v996, 0.0
        %v1021 = vcombine.high %v1003, 0.0
        %v1022 = vcombine.high %v1012, 0.0
        %v1023 = vcombine.high %v1019, 0.0
        %v1024 = vcombine.low %v996, %v1003
        %v1026 = vunpack.c.l.s4 1983009808
        %v1027 = vunpack.c.0.s8 %v1026
        %v1028 = vlaneseq
        %v1029 = vshrl.u32 %v1028, 7
        %v1030 = vsub.s32 %v1027, %v1029
        %v1031 = vrot.slane %v1024, %v1030
        %v1032 = vcombine.low %v1020, %v1021
        %v1034 = vunpack.c.l.s4 1983009808
        %v1035 = vunpack.c.0.s8 %v1034
        %v1036 = vlaneseq
        %v1037 = vshrl.u32 %v1036, 7
        %v1038 = vsub.s32 %v1035, %v1037
        %v1039 = vrot.slane %v1032, %v1038
        %v1040 = vcombine.low %v1012, %v1019
        %v1042 = vunpack.c.l.s4 1983009808
        %v1043 = vunpack.c.0.s8 %v1042
        %v1044 = vlaneseq
        %v1045 = vshrl.u32 %v1044, 7
        %v1046 = vsub.s32 %v1043, %v1045
        %v1047 = vrot.slane %v1040, %v1046
        %v1048 = vcombine.low %v1022, %v1023
        %v1050 = vunpack.c.l.s4 1983009808
        %v1051 = vunpack.c.0.s8 %v1050
        %v1052 = vlaneseq
        %v1053 = vshrl.u32 %v1052, 7
        %v1054 = vsub.s32 %v1051, %v1053
        %v1055 = vrot.slane %v1048, %v1054
        %v1056 = vcombine.low %v1031, %v1039
        %v1057 = vcombine.high %v1031, %v1039
        %v1059 = vunpack.c.l.s4 1934713408
        %v1060 = vunpack.c.0.s8 %v1059
        %v1061 = vlaneseq
        %v1062 = vshrl.u32 %v1061, 7
        %v1063 = vsub.s32 %v1060, %v1062
        %v1064 = vrot.slane %v1056, %v1063
        %v1066 = vunpack.c.l.s4 1934713408
        %v1067 = vunpack.c.0.s8 %v1066
        %v1068 = vlaneseq
        %v1069 = vshrl.u32 %v1068, 7
        %v1070 = vsub.s32 %v1067, %v1069
        %v1071 = vrot.slane %v1057, %v1070
        %v1072 = vcombine.low %v1047, %v1055
        %v1073 = vcombine.high %v1047, %v1055
        %v1075 = vunpack.c.l.s4 1934713408
        %v1076 = vunpack.c.0.s8 %v1075
        %v1077 = vlaneseq
        %v1078 = vshrl.u32 %v1077, 7
        %v1079 = vsub.s32 %v1076, %v1078
        %v1080 = vrot.slane %v1072, %v1079
        %v1082 = vunpack.c.l.s4 1934713408
        %v1083 = vunpack.c.0.s8 %v1082
        %v1084 = vlaneseq
        %v1085 = vshrl.u32 %v1084, 7
        %v1086 = vsub.s32 %v1083, %v1085
        %v1087 = vrot.slane %v1073, %v1086
        %v1088 = vcombine.low %v1064, %v1080
        %v1089 = vcombine.high %v1064, %v1080
        %v1090 = vcombine.low %v1071, %v1087
        %v1091 = vcombine.high %v1071, %v1087
        %v1092 = vpack.c.bf16 %v1088, %v1088
        %v1093 = vpack.c.bf16 %v1089, %v1089
        %v1094 = vpack.c.bf16 %v1090, %v1090
        %v1095 = vpack.c.bf16 %v1091, %v1091
        %1097 = vrot.lane.b32.xlu0 %v655, 120
        %v1098 = vpop.permute.xlu0 %1097
        %1100 = vrot.lane.b32.xlu0 %v655, 112
        %v1101 = vpop.permute.xlu0 %1100
        %1103 = vrot.lane.b32.xlu0 %v655, 104
        %v1104 = vpop.permute.xlu0 %1103
        %v1106 = vcombine.low %v655, %v1101
        %v1107 = vcombine.high %v655, %v1101
        %v1109 = vunpack.c.l.s4 1983009808
        %v1110 = vunpack.c.0.s8 %v1109
        %v1111 = vlaneseq
        %v1112 = vshrl.u32 %v1111, 7
        %v1113 = vsub.s32 %v1110, %v1112
        %v1114 = vrot.slane %v1106, %v1113
        %v1116 = vunpack.c.l.s4 1983009808
        %v1117 = vunpack.c.0.s8 %v1116
        %v1118 = vlaneseq
        %v1119 = vshrl.u32 %v1118, 7
        %v1120 = vsub.s32 %v1117, %v1119
        %v1121 = vrot.slane %v1107, %v1120
        %v1122 = vcombine.low %v1098, %v1104
        %v1123 = vcombine.high %v1098, %v1104
        %v1125 = vunpack.c.l.s4 1983009808
        %v1126 = vunpack.c.0.s8 %v1125
        %v1127 = vlaneseq
        %v1128 = vshrl.u32 %v1127, 7
        %v1129 = vsub.s32 %v1126, %v1128
        %v1130 = vrot.slane %v1122, %v1129
        %v1132 = vunpack.c.l.s4 1983009808
        %v1133 = vunpack.c.0.s8 %v1132
        %v1134 = vlaneseq
        %v1135 = vshrl.u32 %v1134, 7
        %v1136 = vsub.s32 %v1133, %v1135
        %v1137 = vrot.slane %v1123, %v1136
        %v1138 = vcombine.low %v1114, %v1130
        %v1139 = vcombine.high %v1114, %v1130
        %v1141 = vunpack.c.l.s4 1934713408
        %v1142 = vunpack.c.0.s8 %v1141
        %v1143 = vlaneseq
        %v1144 = vshrl.u32 %v1143, 7
        %v1145 = vsub.s32 %v1142, %v1144
        %v1146 = vrot.slane %v1138, %v1145
        %v1148 = vunpack.c.l.s4 1934713408
        %v1149 = vunpack.c.0.s8 %v1148
        %v1150 = vlaneseq
        %v1151 = vshrl.u32 %v1150, 7
        %v1152 = vsub.s32 %v1149, %v1151
        %v1153 = vrot.slane %v1139, %v1152
        %v1154 = vcombine.low %v1121, %v1137
        %v1155 = vcombine.high %v1121, %v1137
        %v1157 = vunpack.c.l.s4 1934713408
        %v1158 = vunpack.c.0.s8 %v1157
        %v1159 = vlaneseq
        %v1160 = vshrl.u32 %v1159, 7
        %v1161 = vsub.s32 %v1158, %v1160
        %v1162 = vrot.slane %v1154, %v1161
        %v1164 = vunpack.c.l.s4 1934713408
        %v1165 = vunpack.c.0.s8 %v1164
        %v1166 = vlaneseq
        %v1167 = vshrl.u32 %v1166, 7
        %v1168 = vsub.s32 %v1165, %v1167
        %v1169 = vrot.slane %v1155, %v1168
        %v1170 = vcombine.high %v1146, 0.0
        %v1171 = vcombine.high %v1153, 0.0
        %v1172 = vcombine.high %v1162, 0.0
        %v1173 = vcombine.high %v1169, 0.0
        %v1174 = vcombine.low %v1146, %v1153
        %v1176 = vunpack.c.l.s4 1983009808
        %v1177 = vunpack.c.0.s8 %v1176
        %v1178 = vlaneseq
        %v1179 = vshrl.u32 %v1178, 7
        %v1180 = vsub.s32 %v1177, %v1179
        %v1181 = vrot.slane %v1174, %v1180
        %v1182 = vcombine.low %v1170, %v1171
        %v1184 = vunpack.c.l.s4 1983009808
        %v1185 = vunpack.c.0.s8 %v1184
        %v1186 = vlaneseq
        %v1187 = vshrl.u32 %v1186, 7
        %v1188 = vsub.s32 %v1185, %v1187
        %v1189 = vrot.slane %v1182, %v1188
        %v1190 = vcombine.low %v1162, %v1169
        %v1192 = vunpack.c.l.s4 1983009808
        %v1193 = vunpack.c.0.s8 %v1192
        %v1194 = vlaneseq
        %v1195 = vshrl.u32 %v1194, 7
        %v1196 = vsub.s32 %v1193, %v1195
        %v1197 = vrot.slane %v1190, %v1196
        %v1198 = vcombine.low %v1172, %v1173
        %v1200 = vunpack.c.l.s4 1983009808
        %v1201 = vunpack.c.0.s8 %v1200
        %v1202 = vlaneseq
        %v1203 = vshrl.u32 %v1202, 7
        %v1204 = vsub.s32 %v1201, %v1203
        %v1205 = vrot.slane %v1198, %v1204
        %v1206 = vcombine.low %v1181, %v1189
        %v1207 = vcombine.high %v1181, %v1189
        %v1209 = vunpack.c.l.s4 1934713408
        %v1210 = vunpack.c.0.s8 %v1209
        %v1211 = vlaneseq
        %v1212 = vshrl.u32 %v1211, 7
        %v1213 = vsub.s32 %v1210, %v1212
        %v1214 = vrot.slane %v1206, %v1213
        %v1216 = vunpack.c.l.s4 1934713408
        %v1217 = vunpack.c.0.s8 %v1216
        %v1218 = vlaneseq
        %v1219 = vshrl.u32 %v1218, 7
        %v1220 = vsub.s32 %v1217, %v1219
        %v1221 = vrot.slane %v1207, %v1220
        %v1222 = vcombine.low %v1197, %v1205
        %v1223 = vcombine.high %v1197, %v1205
        %v1225 = vunpack.c.l.s4 1934713408
        %v1226 = vunpack.c.0.s8 %v1225
        %v1227 = vlaneseq
        %v1228 = vshrl.u32 %v1227, 7
        %v1229 = vsub.s32 %v1226, %v1228
        %v1230 = vrot.slane %v1222, %v1229
        %v1232 = vunpack.c.l.s4 1934713408
        %v1233 = vunpack.c.0.s8 %v1232
        %v1234 = vlaneseq
        %v1235 = vshrl.u32 %v1234, 7
        %v1236 = vsub.s32 %v1233, %v1235
        %v1237 = vrot.slane %v1223, %v1236
        %v1238 = vcombine.low %v1214, %v1230
        %v1239 = vcombine.high %v1214, %v1230
        %v1240 = vcombine.low %v1221, %v1237
        %v1241 = vcombine.high %v1221, %v1237
        %v1242 = vpack.c.bf16 %v1238, %v1238
        %v1243 = vpack.c.bf16 %v1239, %v1239
        %v1244 = vpack.c.bf16 %v1240, %v1240
        %v1245 = vpack.c.bf16 %v1241, %v1241
        %1247 = vrot.lane.b32.xlu0 %v723, 120
        %v1248 = vpop.permute.xlu0 %1247
        %1250 = vrot.lane.b32.xlu0 %v723, 112
        %v1251 = vpop.permute.xlu0 %1250
        %1253 = vrot.lane.b32.xlu0 %v723, 104
        %v1254 = vpop.permute.xlu0 %1253
        %v1256 = vcombine.low %v723, %v1251
        %v1257 = vcombine.high %v723, %v1251
        %v1259 = vunpack.c.l.s4 1983009808
        %v1260 = vunpack.c.0.s8 %v1259
        %v1261 = vlaneseq
        %v1262 = vshrl.u32 %v1261, 7
        %v1263 = vsub.s32 %v1260, %v1262
        %v1264 = vrot.slane %v1256, %v1263
        %v1266 = vunpack.c.l.s4 1983009808
        %v1267 = vunpack.c.0.s8 %v1266
        %v1268 = vlaneseq
        %v1269 = vshrl.u32 %v1268, 7
        %v1270 = vsub.s32 %v1267, %v1269
        %v1271 = vrot.slane %v1257, %v1270
        %v1272 = vcombine.low %v1248, %v1254
        %v1273 = vcombine.high %v1248, %v1254
        %v1275 = vunpack.c.l.s4 1983009808
        %v1276 = vunpack.c.0.s8 %v1275
        %v1277 = vlaneseq
        %v1278 = vshrl.u32 %v1277, 7
        %v1279 = vsub.s32 %v1276, %v1278
        %v1280 = vrot.slane %v1272, %v1279
        %v1282 = vunpack.c.l.s4 1983009808
        %v1283 = vunpack.c.0.s8 %v1282
        %v1284 = vlaneseq
        %v1285 = vshrl.u32 %v1284, 7
        %v1286 = vsub.s32 %v1283, %v1285
        %v1287 = vrot.slane %v1273, %v1286
        %v1288 = vcombine.low %v1264, %v1280
        %v1289 = vcombine.high %v1264, %v1280
        %v1291 = vunpack.c.l.s4 1934713408
        %v1292 = vunpack.c.0.s8 %v1291
        %v1293 = vlaneseq
        %v1294 = vshrl.u32 %v1293, 7
        %v1295 = vsub.s32 %v1292, %v1294
        %v1296 = vrot.slane %v1288, %v1295
        %v1298 = vunpack.c.l.s4 1934713408
        %v1299 = vunpack.c.0.s8 %v1298
        %v1300 = vlaneseq
        %v1301 = vshrl.u32 %v1300, 7
        %v1302 = vsub.s32 %v1299, %v1301
        %v1303 = vrot.slane %v1289, %v1302
        %v1304 = vcombine.low %v1271, %v1287
        %v1305 = vcombine.high %v1271, %v1287
        %v1307 = vunpack.c.l.s4 1934713408
        %v1308 = vunpack.c.0.s8 %v1307
        %v1309 = vlaneseq
        %v1310 = vshrl.u32 %v1309, 7
        %v1311 = vsub.s32 %v1308, %v1310
        %v1312 = vrot.slane %v1304, %v1311
        %v1314 = vunpack.c.l.s4 1934713408
        %v1315 = vunpack.c.0.s8 %v1314
        %v1316 = vlaneseq
        %v1317 = vshrl.u32 %v1316, 7
        %v1318 = vsub.s32 %v1315, %v1317
        %v1319 = vrot.slane %v1305, %v1318
        %v1320 = vcombine.high %v1296, 0.0
        %v1321 = vcombine.high %v1303, 0.0
        %v1322 = vcombine.high %v1312, 0.0
        %v1323 = vcombine.high %v1319, 0.0
        %v1324 = vcombine.low %v1296, %v1303
        %v1326 = vunpack.c.l.s4 1983009808
        %v1327 = vunpack.c.0.s8 %v1326
        %v1328 = vlaneseq
        %v1329 = vshrl.u32 %v1328, 7
        %v1330 = vsub.s32 %v1327, %v1329
        %v1331 = vrot.slane %v1324, %v1330
        %v1332 = vcombine.low %v1320, %v1321
        %v1334 = vunpack.c.l.s4 1983009808
        %v1335 = vunpack.c.0.s8 %v1334
        %v1336 = vlaneseq
        %v1337 = vshrl.u32 %v1336, 7
        %v1338 = vsub.s32 %v1335, %v1337
        %v1339 = vrot.slane %v1332, %v1338
        %v1340 = vcombine.low %v1312, %v1319
        %v1342 = vunpack.c.l.s4 1983009808
        %v1343 = vunpack.c.0.s8 %v1342
        %v1344 = vlaneseq
        %v1345 = vshrl.u32 %v1344, 7
        %v1346 = vsub.s32 %v1343, %v1345
        %v1347 = vrot.slane %v1340, %v1346
        %v1348 = vcombine.low %v1322, %v1323
        %v1350 = vunpack.c.l.s4 1983009808
        %v1351 = vunpack.c.0.s8 %v1350
        %v1352 = vlaneseq
        %v1353 = vshrl.u32 %v1352, 7
        %v1354 = vsub.s32 %v1351, %v1353
        %v1355 = vrot.slane %v1348, %v1354
        %v1356 = vcombine.low %v1331, %v1339
        %v1357 = vcombine.high %v1331, %v1339
        %v1359 = vunpack.c.l.s4 1934713408
        %v1360 = vunpack.c.0.s8 %v1359
        %v1361 = vlaneseq
        %v1362 = vshrl.u32 %v1361, 7
        %v1363 = vsub.s32 %v1360, %v1362
        %v1364 = vrot.slane %v1356, %v1363
        %v1366 = vunpack.c.l.s4 1934713408
        %v1367 = vunpack.c.0.s8 %v1366
        %v1368 = vlaneseq
        %v1369 = vshrl.u32 %v1368, 7
        %v1370 = vsub.s32 %v1367, %v1369
        %v1371 = vrot.slane %v1357, %v1370
        %v1372 = vcombine.low %v1347, %v1355
        %v1373 = vcombine.high %v1347, %v1355
        %v1375 = vunpack.c.l.s4 1934713408
        %v1376 = vunpack.c.0.s8 %v1375
        %v1377 = vlaneseq
        %v1378 = vshrl.u32 %v1377, 7
        %v1379 = vsub.s32 %v1376, %v1378
        %v1380 = vrot.slane %v1372, %v1379
        %v1382 = vunpack.c.l.s4 1934713408
        %v1383 = vunpack.c.0.s8 %v1382
        %v1384 = vlaneseq
        %v1385 = vshrl.u32 %v1384, 7
        %v1386 = vsub.s32 %v1383, %v1385
        %v1387 = vrot.slane %v1373, %v1386
        %v1388 = vcombine.low %v1364, %v1380
        %v1389 = vcombine.high %v1364, %v1380
        %v1390 = vcombine.low %v1371, %v1387
        %v1391 = vcombine.high %v1371, %v1387
        %v1392 = vpack.c.bf16 %v1388, %v1388
        %v1393 = vpack.c.bf16 %v1389, %v1389
        %v1394 = vpack.c.bf16 %v1390, %v1390
        %v1395 = vpack.c.bf16 %v1391, %v1391
        %1397 = vrot.lane.b32.xlu0 %v791, 120
        %v1398 = vpop.permute.xlu0 %1397
        %1400 = vrot.lane.b32.xlu0 %v791, 112
        %v1401 = vpop.permute.xlu0 %1400
        %1403 = vrot.lane.b32.xlu0 %v791, 104
        %v1404 = vpop.permute.xlu0 %1403
        %v1406 = vcombine.low %v791, %v1401
        %v1407 = vcombine.high %v791, %v1401
        %v1409 = vunpack.c.l.s4 1983009808
        %v1410 = vunpack.c.0.s8 %v1409
        %v1411 = vlaneseq
        %v1412 = vshrl.u32 %v1411, 7
        %v1413 = vsub.s32 %v1410, %v1412
        %v1414 = vrot.slane %v1406, %v1413
        %v1416 = vunpack.c.l.s4 1983009808
        %v1417 = vunpack.c.0.s8 %v1416
        %v1418 = vlaneseq
        %v1419 = vshrl.u32 %v1418, 7
        %v1420 = vsub.s32 %v1417, %v1419
        %v1421 = vrot.slane %v1407, %v1420
        %v1422 = vcombine.low %v1398, %v1404
        %v1423 = vcombine.high %v1398, %v1404
        %v1425 = vunpack.c.l.s4 1983009808
        %v1426 = vunpack.c.0.s8 %v1425
        %v1427 = vlaneseq
        %v1428 = vshrl.u32 %v1427, 7
        %v1429 = vsub.s32 %v1426, %v1428
        %v1430 = vrot.slane %v1422, %v1429
        %v1432 = vunpack.c.l.s4 1983009808
        %v1433 = vunpack.c.0.s8 %v1432
        %v1434 = vlaneseq
        %v1435 = vshrl.u32 %v1434, 7
        %v1436 = vsub.s32 %v1433, %v1435
        %v1437 = vrot.slane %v1423, %v1436
        %v1438 = vcombine.low %v1414, %v1430
        %v1439 = vcombine.high %v1414, %v1430
        %v1441 = vunpack.c.l.s4 1934713408
        %v1442 = vunpack.c.0.s8 %v1441
        %v1443 = vlaneseq
        %v1444 = vshrl.u32 %v1443, 7
        %v1445 = vsub.s32 %v1442, %v1444
        %v1446 = vrot.slane %v1438, %v1445
        %v1448 = vunpack.c.l.s4 1934713408
        %v1449 = vunpack.c.0.s8 %v1448
        %v1450 = vlaneseq
        %v1451 = vshrl.u32 %v1450, 7
        %v1452 = vsub.s32 %v1449, %v1451
        %v1453 = vrot.slane %v1439, %v1452
        %v1454 = vcombine.low %v1421, %v1437
        %v1455 = vcombine.high %v1421, %v1437
        %v1457 = vunpack.c.l.s4 1934713408
        %v1458 = vunpack.c.0.s8 %v1457
        %v1459 = vlaneseq
        %v1460 = vshrl.u32 %v1459, 7
        %v1461 = vsub.s32 %v1458, %v1460
        %v1462 = vrot.slane %v1454, %v1461
        %v1464 = vunpack.c.l.s4 1934713408
        %v1465 = vunpack.c.0.s8 %v1464
        %v1466 = vlaneseq
        %v1467 = vshrl.u32 %v1466, 7
        %v1468 = vsub.s32 %v1465, %v1467
        %v1469 = vrot.slane %v1455, %v1468
        %v1470 = vcombine.high %v1446, 0.0
        %v1471 = vcombine.high %v1453, 0.0
        %v1472 = vcombine.high %v1462, 0.0
        %v1473 = vcombine.high %v1469, 0.0
        %v1474 = vcombine.low %v1446, %v1453
        %v1476 = vunpack.c.l.s4 1983009808
        %v1477 = vunpack.c.0.s8 %v1476
        %v1478 = vlaneseq
        %v1479 = vshrl.u32 %v1478, 7
        %v1480 = vsub.s32 %v1477, %v1479
        %v1481 = vrot.slane %v1474, %v1480
        %v1482 = vcombine.low %v1470, %v1471
        %v1484 = vunpack.c.l.s4 1983009808
        %v1485 = vunpack.c.0.s8 %v1484
        %v1486 = vlaneseq
        %v1487 = vshrl.u32 %v1486, 7
        %v1488 = vsub.s32 %v1485, %v1487
        %v1489 = vrot.slane %v1482, %v1488
        %v1490 = vcombine.low %v1462, %v1469
        %v1492 = vunpack.c.l.s4 1983009808
        %v1493 = vunpack.c.0.s8 %v1492
        %v1494 = vlaneseq
        %v1495 = vshrl.u32 %v1494, 7
        %v1496 = vsub.s32 %v1493, %v1495
        %v1497 = vrot.slane %v1490, %v1496
        %v1498 = vcombine.low %v1472, %v1473
        %v1500 = vunpack.c.l.s4 1983009808
        %v1501 = vunpack.c.0.s8 %v1500
        %v1502 = vlaneseq
        %v1503 = vshrl.u32 %v1502, 7
        %v1504 = vsub.s32 %v1501, %v1503
        %v1505 = vrot.slane %v1498, %v1504
        %v1506 = vcombine.low %v1481, %v1489
        %v1507 = vcombine.high %v1481, %v1489
        %v1509 = vunpack.c.l.s4 1934713408
        %v1510 = vunpack.c.0.s8 %v1509
        %v1511 = vlaneseq
        %v1512 = vshrl.u32 %v1511, 7
        %v1513 = vsub.s32 %v1510, %v1512
        %v1514 = vrot.slane %v1506, %v1513
        %v1516 = vunpack.c.l.s4 1934713408
        %v1517 = vunpack.c.0.s8 %v1516
        %v1518 = vlaneseq
        %v1519 = vshrl.u32 %v1518, 7
        %v1520 = vsub.s32 %v1517, %v1519
        %v1521 = vrot.slane %v1507, %v1520
        %v1522 = vcombine.low %v1497, %v1505
        %v1523 = vcombine.high %v1497, %v1505
        %v1525 = vunpack.c.l.s4 1934713408
        %v1526 = vunpack.c.0.s8 %v1525
        %v1527 = vlaneseq
        %v1528 = vshrl.u32 %v1527, 7
        %v1529 = vsub.s32 %v1526, %v1528
        %v1530 = vrot.slane %v1522, %v1529
        %v1532 = vunpack.c.l.s4 1934713408
        %v1533 = vunpack.c.0.s8 %v1532
        %v1534 = vlaneseq
        %v1535 = vshrl.u32 %v1534, 7
        %v1536 = vsub.s32 %v1533, %v1535
        %v1537 = vrot.slane %v1523, %v1536
        %v1538 = vcombine.low %v1514, %v1530
        %v1539 = vcombine.high %v1514, %v1530
        %v1540 = vcombine.low %v1521, %v1537
        %v1541 = vcombine.high %v1521, %v1537
        %v1542 = vpack.c.bf16 %v1538, %v1538
        %v1543 = vpack.c.bf16 %v1539, %v1539
        %v1544 = vpack.c.bf16 %v1540, %v1540
        %v1545 = vpack.c.bf16 %v1541, %v1541
        %vm1546 = vcmask 64512
        %v1548 = vsel %vm1546, %v1092, 0
        %v1551 = vsel %vm1546, %v1392, 0
        %1553 = vmatprep.subr.bf16.mxu0 0
        %1554 = vmatpush1.bf16.xpose.msra.mxu0 %v1551
        %1555 = vmatprep.subr.bf16.mxu0 0
        %1556 = vmatpush1.bf16.xpose.msra.mxu0 0
        %1557 = vmatprep.subr.bf16.mxu0 0
        %1558 = vmatpush1.bf16.xpose.msra.mxu0 0
        %1559 = vmatprep.subr.bf16.mxu0 0
        %1560 = vmatpush1.bf16.xpose.msra.mxu0 0
        %1561 = vmatprep.subr.bf16.mxu0 0
        %1562 = vmatpush1.bf16.xpose.msra.mxu0 0
        %1563 = vmatprep.subr.bf16.mxu0 0
        %1564 = vmatpush1.bf16.xpose.msra.mxu0 0
        %1565 = vmatprep.subr.bf16.mxu0 0
        %1566 = vmatpush1.bf16.xpose.msra.mxu0 0
        %1567 = vmatprep.subr.bf16.mxu0 0
        %1568 = vmatpush1.bf16.xpose.msra.mxu0 0
        %1569 = vmatprep.subr.bf16.mxu0 0
        %1570 = vmatpush1.bf16.xpose.msra.mxu0 0
        %1571 = vmatprep.subr.bf16.mxu0 0
        %1572 = vmatpush1.bf16.xpose.msra.mxu0 0
        %1573 = vmatprep.subr.bf16.mxu0 0
        %1574 = vmatpush1.bf16.xpose.msra.mxu0 0
        %1575 = vmatprep.subr.bf16.mxu0 0
        %1576 = vmatpush1.bf16.xpose.msra.mxu0 0
        %1577 = vmatprep.subr.bf16.mxu0 0
        %1578 = vmatpush1.bf16.xpose.msra.mxu0 0
        %1579 = vmatprep.subr.bf16.mxu0 0
        %1580 = vmatpush1.bf16.xpose.msra.mxu0 0
        %1581 = vmatprep.subr.bf16.mxu0 0
        %1582 = vmatpush1.bf16.xpose.msra.mxu0 0
        %1583 = vmatprep.subr.bf16.mxu0 0
        %1584 = vmatpush1.bf16.xpose.msra.mxu0 0
        %1585 = vmatprep.mubr.bf16.mxu0 0
        %1586 = vmatmul.mubr.bf16.gmra.mrb[0].mxu0 %v1548
        %v1587 = vpop.f32.mrb[0].mxu0
        %v1588 = vadd.f32 0.0, %v1587
        %v1589 = vpop.f32.mrb[0].mxu0
        %v1590 = vpop.f32.mrb[0].mxu0
        %v1591 = vpop.f32.mrb[0].mxu0
        %1592 = vdwg.mxu0
        %v1594 = vsel %vm1546, %v1093, 0
        %v1597 = vsel %vm1546, %v1393, 0
        %1599 = vmatprep.subr.bf16.mxu0 0
        %1600 = vmatpush1.bf16.xpose.msra.mxu0 %v1597
        %1601 = vmatprep.subr.bf16.mxu0 0
        %1602 = vmatpush1.bf16.xpose.msra.mxu0 0
        %1603 = vmatprep.subr.bf16.mxu0 0
        %1604 = vmatpush1.bf16.xpose.msra.mxu0 0
        %1605 = vmatprep.subr.bf16.mxu0 0
        %1606 = vmatpush1.bf16.xpose.msra.mxu0 0
        %1607 = vmatprep.subr.bf16.mxu0 0
        %1608 = vmatpush1.bf16.xpose.msra.mxu0 0
        %1609 = vmatprep.subr.bf16.mxu0 0
        %1610 = vmatpush1.bf16.xpose.msra.mxu0 0
        %1611 = vmatprep.subr.bf16.mxu0 0
        %1612 = vmatpush1.bf16.xpose.msra.mxu0 0
        %1613 = vmatprep.subr.bf16.mxu0 0
        %1614 = vmatpush1.bf16.xpose.msra.mxu0 0
        %1615 = vmatprep.subr.bf16.mxu0 0
        %1616 = vmatpush1.bf16.xpose.msra.mxu0 0
        %1617 = vmatprep.subr.bf16.mxu0 0
        %1618 = vmatpush1.bf16.xpose.msra.mxu0 0
        %1619 = vmatprep.subr.bf16.mxu0 0
        %1620 = vmatpush1.bf16.xpose.msra.mxu0 0
        %1621 = vmatprep.subr.bf16.mxu0 0
        %1622 = vmatpush1.bf16.xpose.msra.mxu0 0
        %1623 = vmatprep.subr.bf16.mxu0 0
        %1624 = vmatpush1.bf16.xpose.msra.mxu0 0
        %1625 = vmatprep.subr.bf16.mxu0 0
        %1626 = vmatpush1.bf16.xpose.msra.mxu0 0
        %1627 = vmatprep.subr.bf16.mxu0 0
        %1628 = vmatpush1.bf16.xpose.msra.mxu0 0
        %1629 = vmatprep.subr.bf16.mxu0 0
        %1630 = vmatpush1.bf16.xpose.msra.mxu0 0
        %1631 = vmatprep.mubr.bf16.mxu0 0
        %1632 = vmatmul.mubr.bf16.gmra.mrb[0].mxu0 %v1594
        %v1633 = vpop.f32.mrb[0].mxu0
        %v1634 = vadd.f32 0.0, %v1633
        %v1635 = vpop.f32.mrb[0].mxu0
        %v1636 = vpop.f32.mrb[0].mxu0
        %v1637 = vpop.f32.mrb[0].mxu0
        %1638 = vdwg.mxu0
        %v1640 = vsel %vm1546, %v1094, 0
        %v1643 = vsel %vm1546, %v1394, 0
        %1645 = vmatprep.subr.bf16.mxu0 0
        %1646 = vmatpush1.bf16.xpose.msra.mxu0 %v1643
        %1647 = vmatprep.subr.bf16.mxu0 0
        %1648 = vmatpush1.bf16.xpose.msra.mxu0 0
        %1649 = vmatprep.subr.bf16.mxu0 0
        %1650 = vmatpush1.bf16.xpose.msra.mxu0 0
        %1651 = vmatprep.subr.bf16.mxu0 0
        %1652 = vmatpush1.bf16.xpose.msra.mxu0 0
        %1653 = vmatprep.subr.bf16.mxu0 0
        %1654 = vmatpush1.bf16.xpose.msra.mxu0 0
        %1655 = vmatprep.subr.bf16.mxu0 0
        %1656 = vmatpush1.bf16.xpose.msra.mxu0 0
        %1657 = vmatprep.subr.bf16.mxu0 0
        %1658 = vmatpush1.bf16.xpose.msra.mxu0 0
        %1659 = vmatprep.subr.bf16.mxu0 0
        %1660 = vmatpush1.bf16.xpose.msra.mxu0 0
        %1661 = vmatprep.subr.bf16.mxu0 0
        %1662 = vmatpush1.bf16.xpose.msra.mxu0 0
        %1663 = vmatprep.subr.bf16.mxu0 0
        %1664 = vmatpush1.bf16.xpose.msra.mxu0 0
        %1665 = vmatprep.subr.bf16.mxu0 0
        %1666 = vmatpush1.bf16.xpose.msra.mxu0 0
        %1667 = vmatprep.subr.bf16.mxu0 0
        %1668 = vmatpush1.bf16.xpose.msra.mxu0 0
        %1669 = vmatprep.subr.bf16.mxu0 0
        %1670 = vmatpush1.bf16.xpose.msra.mxu0 0
        %1671 = vmatprep.subr.bf16.mxu0 0
        %1672 = vmatpush1.bf16.xpose.msra.mxu0 0
        %1673 = vmatprep.subr.bf16.mxu0 0
        %1674 = vmatpush1.bf16.xpose.msra.mxu0 0
        %1675 = vmatprep.subr.bf16.mxu0 0
        %1676 = vmatpush1.bf16.xpose.msra.mxu0 0
        %1677 = vmatprep.mubr.bf16.mxu0 0
        %1678 = vmatmul.mubr.bf16.gmra.mrb[0].mxu0 %v1640
        %v1679 = vpop.f32.mrb[0].mxu0
        %v1680 = vadd.f32 0.0, %v1679
        %v1681 = vpop.f32.mrb[0].mxu0
        %v1682 = vpop.f32.mrb[0].mxu0
        %v1683 = vpop.f32.mrb[0].mxu0
        %1684 = vdwg.mxu0
        %v1686 = vsel %vm1546, %v1095, 0
        %v1689 = vsel %vm1546, %v1395, 0
        %1691 = vmatprep.subr.bf16.mxu0 0
        %1692 = vmatpush1.bf16.xpose.msra.mxu0 %v1689
        %1693 = vmatprep.subr.bf16.mxu0 0
        %1694 = vmatpush1.bf16.xpose.msra.mxu0 0
        %1695 = vmatprep.subr.bf16.mxu0 0
        %1696 = vmatpush1.bf16.xpose.msra.mxu0 0
        %1697 = vmatprep.subr.bf16.mxu0 0
        %1698 = vmatpush1.bf16.xpose.msra.mxu0 0
        %1699 = vmatprep.subr.bf16.mxu0 0
        %1700 = vmatpush1.bf16.xpose.msra.mxu0 0
        %1701 = vmatprep.subr.bf16.mxu0 0
        %1702 = vmatpush1.bf16.xpose.msra.mxu0 0
        %1703 = vmatprep.subr.bf16.mxu0 0
        %1704 = vmatpush1.bf16.xpose.msra.mxu0 0
        %1705 = vmatprep.subr.bf16.mxu0 0
        %1706 = vmatpush1.bf16.xpose.msra.mxu0 0
        %1707 = vmatprep.subr.bf16.mxu0 0
        %1708 = vmatpush1.bf16.xpose.msra.mxu0 0
        %1709 = vmatprep.subr.bf16.mxu0 0
        %1710 = vmatpush1.bf16.xpose.msra.mxu0 0
        %1711 = vmatprep.subr.bf16.mxu0 0
        %1712 = vmatpush1.bf16.xpose.msra.mxu0 0
        %1713 = vmatprep.subr.bf16.mxu0 0
        %1714 = vmatpush1.bf16.xpose.msra.mxu0 0
        %1715 = vmatprep.subr.bf16.mxu0 0
        %1716 = vmatpush1.bf16.xpose.msra.mxu0 0
        %1717 = vmatprep.subr.bf16.mxu0 0
        %1718 = vmatpush1.bf16.xpose.msra.mxu0 0
        %1719 = vmatprep.subr.bf16.mxu0 0
        %1720 = vmatpush1.bf16.xpose.msra.mxu0 0
        %1721 = vmatprep.subr.bf16.mxu0 0
        %1722 = vmatpush1.bf16.xpose.msra.mxu0 0
        %1723 = vmatprep.mubr.bf16.mxu0 0
        %1724 = vmatmul.mubr.bf16.gmra.mrb[0].mxu0 %v1686
        %v1725 = vpop.f32.mrb[0].mxu0
        %v1726 = vadd.f32 0.0, %v1725
        %v1727 = vpop.f32.mrb[0].mxu0
        %v1728 = vpop.f32.mrb[0].mxu0
        %v1729 = vpop.f32.mrb[0].mxu0
        %1730 = vdwg.mxu0
        %v1732 = vsel %vm1546, %v942, 0
        %v1735 = vsel %vm1546, %v1242, 0
        %1737 = vmatprep.subr.bf16.mxu0 0
        %1738 = vmatpush1.bf16.xpose.msra.mxu0 %v1735
        %1739 = vmatprep.subr.bf16.mxu0 0
        %1740 = vmatpush1.bf16.xpose.msra.mxu0 0
        %1741 = vmatprep.subr.bf16.mxu0 0
        %1742 = vmatpush1.bf16.xpose.msra.mxu0 0
        %1743 = vmatprep.subr.bf16.mxu0 0
        %1744 = vmatpush1.bf16.xpose.msra.mxu0 0
        %1745 = vmatprep.subr.bf16.mxu0 0
        %1746 = vmatpush1.bf16.xpose.msra.mxu0 0
        %1747 = vmatprep.subr.bf16.mxu0 0
        %1748 = vmatpush1.bf16.xpose.msra.mxu0 0
        %1749 = vmatprep.subr.bf16.mxu0 0
        %1750 = vmatpush1.bf16.xpose.msra.mxu0 0
        %1751 = vmatprep.subr.bf16.mxu0 0
        %1752 = vmatpush1.bf16.xpose.msra.mxu0 0
        %1753 = vmatprep.subr.bf16.mxu0 0
        %1754 = vmatpush1.bf16.xpose.msra.mxu0 0
        %1755 = vmatprep.subr.bf16.mxu0 0
        %1756 = vmatpush1.bf16.xpose.msra.mxu0 0
        %1757 = vmatprep.subr.bf16.mxu0 0
        %1758 = vmatpush1.bf16.xpose.msra.mxu0 0
        %1759 = vmatprep.subr.bf16.mxu0 0
        %1760 = vmatpush1.bf16.xpose.msra.mxu0 0
        %1761 = vmatprep.subr.bf16.mxu0 0
        %1762 = vmatpush1.bf16.xpose.msra.mxu0 0
        %1763 = vmatprep.subr.bf16.mxu0 0
        %1764 = vmatpush1.bf16.xpose.msra.mxu0 0
        %1765 = vmatprep.subr.bf16.mxu0 0
        %1766 = vmatpush1.bf16.xpose.msra.mxu0 0
        %1767 = vmatprep.subr.bf16.mxu0 0
        %1768 = vmatpush1.bf16.xpose.msra.mxu0 0
        %1769 = vmatprep.mubr.bf16.mxu0 0
        %1770 = vmatmul.mubr.bf16.gmra.mrb[0].mxu0 %v1732
        %v1771 = vpop.f32.mrb[0].mxu0
        %v1772 = vadd.f32 %v1588, %v1771
        %v1773 = vpop.f32.mrb[0].mxu0
        %v1774 = vpop.f32.mrb[0].mxu0
        %v1775 = vpop.f32.mrb[0].mxu0
        %1776 = vdwg.mxu0
        %v1778 = vsel %vm1546, %v943, 0
        %v1781 = vsel %vm1546, %v1243, 0
        %1783 = vmatprep.subr.bf16.mxu0 0
        %1784 = vmatpush1.bf16.xpose.msra.mxu0 %v1781
        %1785 = vmatprep.subr.bf16.mxu0 0
        %1786 = vmatpush1.bf16.xpose.msra.mxu0 0
        %1787 = vmatprep.subr.bf16.mxu0 0
        %1788 = vmatpush1.bf16.xpose.msra.mxu0 0
        %1789 = vmatprep.subr.bf16.mxu0 0
        %1790 = vmatpush1.bf16.xpose.msra.mxu0 0
        %1791 = vmatprep.subr.bf16.mxu0 0
        %1792 = vmatpush1.bf16.xpose.msra.mxu0 0
        %1793 = vmatprep.subr.bf16.mxu0 0
        %1794 = vmatpush1.bf16.xpose.msra.mxu0 0
        %1795 = vmatprep.subr.bf16.mxu0 0
        %1796 = vmatpush1.bf16.xpose.msra.mxu0 0
        %1797 = vmatprep.subr.bf16.mxu0 0
        %1798 = vmatpush1.bf16.xpose.msra.mxu0 0
        %1799 = vmatprep.subr.bf16.mxu0 0
        %1800 = vmatpush1.bf16.xpose.msra.mxu0 0
        %1801 = vmatprep.subr.bf16.mxu0 0
        %1802 = vmatpush1.bf16.xpose.msra.mxu0 0
        %1803 = vmatprep.subr.bf16.mxu0 0
        %1804 = vmatpush1.bf16.xpose.msra.mxu0 0
        %1805 = vmatprep.subr.bf16.mxu0 0
        %1806 = vmatpush1.bf16.xpose.msra.mxu0 0
        %1807 = vmatprep.subr.bf16.mxu0 0
        %1808 = vmatpush1.bf16.xpose.msra.mxu0 0
        %1809 = vmatprep.subr.bf16.mxu0 0
        %1810 = vmatpush1.bf16.xpose.msra.mxu0 0
        %1811 = vmatprep.subr.bf16.mxu0 0
        %1812 = vmatpush1.bf16.xpose.msra.mxu0 0
        %1813 = vmatprep.subr.bf16.mxu0 0
        %1814 = vmatpush1.bf16.xpose.msra.mxu0 0
        %1815 = vmatprep.mubr.bf16.mxu0 0
        %1816 = vmatmul.mubr.bf16.gmra.mrb[0].mxu0 %v1778
        %v1817 = vpop.f32.mrb[0].mxu0
        %v1818 = vadd.f32 %v1634, %v1817
        %v1819 = vpop.f32.mrb[0].mxu0
        %v1820 = vpop.f32.mrb[0].mxu0
        %v1821 = vpop.f32.mrb[0].mxu0
        %1822 = vdwg.mxu0
        %v1824 = vsel %vm1546, %v944, 0
        %v1827 = vsel %vm1546, %v1244, 0
        %1829 = vmatprep.subr.bf16.mxu0 0
        %1830 = vmatpush1.bf16.xpose.msra.mxu0 %v1827
        %1831 = vmatprep.subr.bf16.mxu0 0
        %1832 = vmatpush1.bf16.xpose.msra.mxu0 0
        %1833 = vmatprep.subr.bf16.mxu0 0
        %1834 = vmatpush1.bf16.xpose.msra.mxu0 0
        %1835 = vmatprep.subr.bf16.mxu0 0
        %1836 = vmatpush1.bf16.xpose.msra.mxu0 0
        %1837 = vmatprep.subr.bf16.mxu0 0
        %1838 = vmatpush1.bf16.xpose.msra.mxu0 0
        %1839 = vmatprep.subr.bf16.mxu0 0
        %1840 = vmatpush1.bf16.xpose.msra.mxu0 0
        %1841 = vmatprep.subr.bf16.mxu0 0
        %1842 = vmatpush1.bf16.xpose.msra.mxu0 0
        %1843 = vmatprep.subr.bf16.mxu0 0
        %1844 = vmatpush1.bf16.xpose.msra.mxu0 0
        %1845 = vmatprep.subr.bf16.mxu0 0
        %1846 = vmatpush1.bf16.xpose.msra.mxu0 0
        %1847 = vmatprep.subr.bf16.mxu0 0
        %1848 = vmatpush1.bf16.xpose.msra.mxu0 0
        %1849 = vmatprep.subr.bf16.mxu0 0
        %1850 = vmatpush1.bf16.xpose.msra.mxu0 0
        %1851 = vmatprep.subr.bf16.mxu0 0
        %1852 = vmatpush1.bf16.xpose.msra.mxu0 0
        %1853 = vmatprep.subr.bf16.mxu0 0
        %1854 = vmatpush1.bf16.xpose.msra.mxu0 0
        %1855 = vmatprep.subr.bf16.mxu0 0
        %1856 = vmatpush1.bf16.xpose.msra.mxu0 0
        %1857 = vmatprep.subr.bf16.mxu0 0
        %1858 = vmatpush1.bf16.xpose.msra.mxu0 0
        %1859 = vmatprep.subr.bf16.mxu0 0
        %1860 = vmatpush1.bf16.xpose.msra.mxu0 0
        %1861 = vmatprep.mubr.bf16.mxu0 0
        %1862 = vmatmul.mubr.bf16.gmra.mrb[0].mxu0 %v1824
        %v1863 = vpop.f32.mrb[0].mxu0
        %v1864 = vadd.f32 %v1680, %v1863
        %v1865 = vpop.f32.mrb[0].mxu0
        %v1866 = vpop.f32.mrb[0].mxu0
        %v1867 = vpop.f32.mrb[0].mxu0
        %1868 = vdwg.mxu0
        %v1870 = vsel %vm1546, %v945, 0
        %v1873 = vsel %vm1546, %v1245, 0
        %1875 = vmatprep.subr.bf16.mxu0 0
        %1876 = vmatpush1.bf16.xpose.msra.mxu0 %v1873
        %1877 = vmatprep.subr.bf16.mxu0 0
        %1878 = vmatpush1.bf16.xpose.msra.mxu0 0
        %1879 = vmatprep.subr.bf16.mxu0 0
        %1880 = vmatpush1.bf16.xpose.msra.mxu0 0
        %1881 = vmatprep.subr.bf16.mxu0 0
        %1882 = vmatpush1.bf16.xpose.msra.mxu0 0
        %1883 = vmatprep.subr.bf16.mxu0 0
        %1884 = vmatpush1.bf16.xpose.msra.mxu0 0
        %1885 = vmatprep.subr.bf16.mxu0 0
        %1886 = vmatpush1.bf16.xpose.msra.mxu0 0
        %1887 = vmatprep.subr.bf16.mxu0 0
        %1888 = vmatpush1.bf16.xpose.msra.mxu0 0
        %1889 = vmatprep.subr.bf16.mxu0 0
        %1890 = vmatpush1.bf16.xpose.msra.mxu0 0
        %1891 = vmatprep.subr.bf16.mxu0 0
        %1892 = vmatpush1.bf16.xpose.msra.mxu0 0
        %1893 = vmatprep.subr.bf16.mxu0 0
        %1894 = vmatpush1.bf16.xpose.msra.mxu0 0
        %1895 = vmatprep.subr.bf16.mxu0 0
        %1896 = vmatpush1.bf16.xpose.msra.mxu0 0
        %1897 = vmatprep.subr.bf16.mxu0 0
        %1898 = vmatpush1.bf16.xpose.msra.mxu0 0
        %1899 = vmatprep.subr.bf16.mxu0 0
        %1900 = vmatpush1.bf16.xpose.msra.mxu0 0
        %1901 = vmatprep.subr.bf16.mxu0 0
        %1902 = vmatpush1.bf16.xpose.msra.mxu0 0
        %1903 = vmatprep.subr.bf16.mxu0 0
        %1904 = vmatpush1.bf16.xpose.msra.mxu0 0
        %1905 = vmatprep.subr.bf16.mxu0 0
        %1906 = vmatpush1.bf16.xpose.msra.mxu0 0
        %1907 = vmatprep.mubr.bf16.mxu0 0
        %1908 = vmatmul.mubr.bf16.gmra.mrb[0].mxu0 %v1870
        %v1909 = vpop.f32.mrb[0].mxu0
        %v1910 = vadd.f32 %v1726, %v1909
        %v1911 = vpop.f32.mrb[0].mxu0
        %v1912 = vpop.f32.mrb[0].mxu0
        %v1913 = vpop.f32.mrb[0].mxu0
        %1914 = vdwg.mxu0
        %v1915 = vsel %vm1546, %v1772, -inf
        %1916 = vmax.xlane.f32.xlu0 %v1915
        %v1917 = vpop.xlane.xlu0 %1916
        %v1918 = vsel %vm1546, %v1818, -inf
        %1919 = vmax.xlane.f32.xlu0 %v1918
        %v1920 = vpop.xlane.xlu0 %1919
        %v1921 = vsel %vm1546, %v1864, -inf
        %1922 = vmax.xlane.f32.xlu0 %v1921
        %v1923 = vpop.xlane.xlu0 %1922
        %v1924 = vsel %vm1546, %v1910, -inf
        %1925 = vmax.xlane.f32.xlu0 %v1924
        %v1926 = vpop.xlane.xlu0 %1925
        %v1927 = vsub.f32 %v1772, %v1917
        %v1928 = vsub.f32 %v1818, %v1920
        %v1929 = vsub.f32 %v1864, %v1923
        %v1930 = vsub.f32 %v1910, %v1926
        %v1931 = vmul.f32 %v1927, 1.442695
        %v1932 = vpow.pop %v1931
        %v1933 = vmul.f32 %v1928, 1.442695
        %v1934 = vpow.pop %v1933
        %v1935 = vmul.f32 %v1929, 1.442695
        %v1936 = vpow.pop %v1935
        %v1937 = vmul.f32 %v1930, 1.442695
        %v1938 = vpow.pop %v1937
        %v1939 = vsel %vm1546, %v1932, 0.0
        %1940 = vadd.xlane.f32.xlu0 %v1939
        %v1941 = vpop.xlane.xlu0 %1940
        %v1942 = vsel %vm1546, %v1934, 0.0
        %1943 = vadd.xlane.f32.xlu0 %v1942
        %v1944 = vpop.xlane.xlu0 %1943
        %v1945 = vsel %vm1546, %v1936, 0.0
        %1946 = vadd.xlane.f32.xlu0 %v1945
        %v1947 = vpop.xlane.xlu0 %1946
        %v1948 = vsel %vm1546, %v1938, 0.0
        %1949 = vadd.xlane.f32.xlu0 %v1948
        %v1950 = vpop.xlane.xlu0 %1949
        %v1951 = vpack.c.bf16 %v1932, %v1932
        %v1952 = vpack.c.bf16 %v1934, %v1934
        %v1953 = vpack.c.bf16 %v1936, %v1936
        %v1954 = vpack.c.bf16 %v1938, %v1938
        %v1956 = vsel %vm1546, %v1951, 0
        %vm1958 = vcmask 1043456
        %v1960 = vsel %vm1958, %v1542, 0
        %1962 = vmatprep.subr.bf16.mxu0 0
        %1963 = vmatpush1.bf16.msra.mxu0 %v1960
        %1964 = vmatprep.subr.bf16.mxu0 0
        %1965 = vmatpush1.bf16.msra.mxu0 0
        %1966 = vmatprep.subr.bf16.mxu0 0
        %1967 = vmatpush1.bf16.msra.mxu0 0
        %1968 = vmatprep.subr.bf16.mxu0 0
        %1969 = vmatpush1.bf16.msra.mxu0 0
        %1970 = vmatprep.subr.bf16.mxu0 0
        %1971 = vmatpush1.bf16.msra.mxu0 0
        %1972 = vmatprep.subr.bf16.mxu0 0
        %1973 = vmatpush1.bf16.msra.mxu0 0
        %1974 = vmatprep.subr.bf16.mxu0 0
        %1975 = vmatpush1.bf16.msra.mxu0 0
        %1976 = vmatprep.subr.bf16.mxu0 0
        %1977 = vmatpush1.bf16.msra.mxu0 0
        %1978 = vmatprep.subr.bf16.mxu0 0
        %1979 = vmatpush1.bf16.msra.mxu0 0
        %1980 = vmatprep.subr.bf16.mxu0 0
        %1981 = vmatpush1.bf16.msra.mxu0 0
        %1982 = vmatprep.subr.bf16.mxu0 0
        %1983 = vmatpush1.bf16.msra.mxu0 0
        %1984 = vmatprep.subr.bf16.mxu0 0
        %1985 = vmatpush1.bf16.msra.mxu0 0
        %1986 = vmatprep.subr.bf16.mxu0 0
        %1987 = vmatpush1.bf16.msra.mxu0 0
        %1988 = vmatprep.subr.bf16.mxu0 0
        %1989 = vmatpush1.bf16.msra.mxu0 0
        %1990 = vmatprep.subr.bf16.mxu0 0
        %1991 = vmatpush1.bf16.msra.mxu0 0
        %1992 = vmatprep.subr.bf16.mxu0 0
        %1993 = vmatpush1.bf16.msra.mxu0 0
        %1994 = vmatprep.mubr.bf16.mxu0 0
        %1995 = vmatmul.mubr.bf16.gmra.mrb[0].mxu0 %v1956
        %v1996 = vpop.f32.mrb[0].mxu0
        %v1997 = vadd.f32 0.0, %v1996
        %v1998 = vpop.f32.mrb[0].mxu0
        %v1999 = vpop.f32.mrb[0].mxu0
        %v2000 = vpop.f32.mrb[0].mxu0
        %2001 = vdwg.mxu0
        %v2003 = vsel %vm1546, %v1952, 0
        %v2006 = vsel %vm1958, %v1543, 0
        %2008 = vmatprep.subr.bf16.mxu0 0
        %2009 = vmatpush1.bf16.msra.mxu0 %v2006
        %2010 = vmatprep.subr.bf16.mxu0 0
        %2011 = vmatpush1.bf16.msra.mxu0 0
        %2012 = vmatprep.subr.bf16.mxu0 0
        %2013 = vmatpush1.bf16.msra.mxu0 0
        %2014 = vmatprep.subr.bf16.mxu0 0
        %2015 = vmatpush1.bf16.msra.mxu0 0
        %2016 = vmatprep.subr.bf16.mxu0 0
        %2017 = vmatpush1.bf16.msra.mxu0 0
        %2018 = vmatprep.subr.bf16.mxu0 0
        %2019 = vmatpush1.bf16.msra.mxu0 0
        %2020 = vmatprep.subr.bf16.mxu0 0
        %2021 = vmatpush1.bf16.msra.mxu0 0
        %2022 = vmatprep.subr.bf16.mxu0 0
        %2023 = vmatpush1.bf16.msra.mxu0 0
        %2024 = vmatprep.subr.bf16.mxu0 0
        %2025 = vmatpush1.bf16.msra.mxu0 0
        %2026 = vmatprep.subr.bf16.mxu0 0
        %2027 = vmatpush1.bf16.msra.mxu0 0
        %2028 = vmatprep.subr.bf16.mxu0 0
        %2029 = vmatpush1.bf16.msra.mxu0 0
        %2030 = vmatprep.subr.bf16.mxu0 0
        %2031 = vmatpush1.bf16.msra.mxu0 0
        %2032 = vmatprep.subr.bf16.mxu0 0
        %2033 = vmatpush1.bf16.msra.mxu0 0
        %2034 = vmatprep.subr.bf16.mxu0 0
        %2035 = vmatpush1.bf16.msra.mxu0 0
        %2036 = vmatprep.subr.bf16.mxu0 0
        %2037 = vmatpush1.bf16.msra.mxu0 0
        %2038 = vmatprep.subr.bf16.mxu0 0
        %2039 = vmatpush1.bf16.msra.mxu0 0
        %2040 = vmatprep.mubr.bf16.mxu0 0
        %2041 = vmatmul.mubr.bf16.gmra.mrb[0].mxu0 %v2003
        %v2042 = vpop.f32.mrb[0].mxu0
        %v2043 = vadd.f32 0.0, %v2042
        %v2044 = vpop.f32.mrb[0].mxu0
        %v2045 = vpop.f32.mrb[0].mxu0
        %v2046 = vpop.f32.mrb[0].mxu0
        %2047 = vdwg.mxu0
        %v2049 = vsel %vm1546, %v1953, 0
        %v2052 = vsel %vm1958, %v1544, 0
        %2054 = vmatprep.subr.bf16.mxu0 0
        %2055 = vmatpush1.bf16.msra.mxu0 %v2052
        %2056 = vmatprep.subr.bf16.mxu0 0
        %2057 = vmatpush1.bf16.msra.mxu0 0
        %2058 = vmatprep.subr.bf16.mxu0 0
        %2059 = vmatpush1.bf16.msra.mxu0 0
        %2060 = vmatprep.subr.bf16.mxu0 0
        %2061 = vmatpush1.bf16.msra.mxu0 0
        %2062 = vmatprep.subr.bf16.mxu0 0
        %2063 = vmatpush1.bf16.msra.mxu0 0
        %2064 = vmatprep.subr.bf16.mxu0 0
        %2065 = vmatpush1.bf16.msra.mxu0 0
        %2066 = vmatprep.subr.bf16.mxu0 0
        %2067 = vmatpush1.bf16.msra.mxu0 0
        %2068 = vmatprep.subr.bf16.mxu0 0
        %2069 = vmatpush1.bf16.msra.mxu0 0
        %2070 = vmatprep.subr.bf16.mxu0 0
        %2071 = vmatpush1.bf16.msra.mxu0 0
        %2072 = vmatprep.subr.bf16.mxu0 0
        %2073 = vmatpush1.bf16.msra.mxu0 0
        %2074 = vmatprep.subr.bf16.mxu0 0
        %2075 = vmatpush1.bf16.msra.mxu0 0
        %2076 = vmatprep.subr.bf16.mxu0 0
        %2077 = vmatpush1.bf16.msra.mxu0 0
        %2078 = vmatprep.subr.bf16.mxu0 0
        %2079 = vmatpush1.bf16.msra.mxu0 0
        %2080 = vmatprep.subr.bf16.mxu0 0
        %2081 = vmatpush1.bf16.msra.mxu0 0
        %2082 = vmatprep.subr.bf16.mxu0 0
        %2083 = vmatpush1.bf16.msra.mxu0 0
        %2084 = vmatprep.subr.bf16.mxu0 0
        %2085 = vmatpush1.bf16.msra.mxu0 0
        %2086 = vmatprep.mubr.bf16.mxu0 0
        %2087 = vmatmul.mubr.bf16.gmra.mrb[0].mxu0 %v2049
        %v2088 = vpop.f32.mrb[0].mxu0
        %v2089 = vadd.f32 0.0, %v2088
        %v2090 = vpop.f32.mrb[0].mxu0
        %v2091 = vpop.f32.mrb[0].mxu0
        %v2092 = vpop.f32.mrb[0].mxu0
        %2093 = vdwg.mxu0
        %v2095 = vsel %vm1546, %v1954, 0
        %v2098 = vsel %vm1958, %v1545, 0
        %2100 = vmatprep.subr.bf16.mxu0 0
        %2101 = vmatpush1.bf16.msra.mxu0 %v2098
        %2102 = vmatprep.subr.bf16.mxu0 0
        %2103 = vmatpush1.bf16.msra.mxu0 0
        %2104 = vmatprep.subr.bf16.mxu0 0
        %2105 = vmatpush1.bf16.msra.mxu0 0
        %2106 = vmatprep.subr.bf16.mxu0 0
        %2107 = vmatpush1.bf16.msra.mxu0 0
        %2108 = vmatprep.subr.bf16.mxu0 0
        %2109 = vmatpush1.bf16.msra.mxu0 0
        %2110 = vmatprep.subr.bf16.mxu0 0
        %2111 = vmatpush1.bf16.msra.mxu0 0
        %2112 = vmatprep.subr.bf16.mxu0 0
        %2113 = vmatpush1.bf16.msra.mxu0 0
        %2114 = vmatprep.subr.bf16.mxu0 0
        %2115 = vmatpush1.bf16.msra.mxu0 0
        %2116 = vmatprep.subr.bf16.mxu0 0
        %2117 = vmatpush1.bf16.msra.mxu0 0
        %2118 = vmatprep.subr.bf16.mxu0 0
        %2119 = vmatpush1.bf16.msra.mxu0 0
        %2120 = vmatprep.subr.bf16.mxu0 0
        %2121 = vmatpush1.bf16.msra.mxu0 0
        %2122 = vmatprep.subr.bf16.mxu0 0
        %2123 = vmatpush1.bf16.msra.mxu0 0
        %2124 = vmatprep.subr.bf16.mxu0 0
        %2125 = vmatpush1.bf16.msra.mxu0 0
        %2126 = vmatprep.subr.bf16.mxu0 0
        %2127 = vmatpush1.bf16.msra.mxu0 0
        %2128 = vmatprep.subr.bf16.mxu0 0
        %2129 = vmatpush1.bf16.msra.mxu0 0
        %2130 = vmatprep.subr.bf16.mxu0 0
        %2131 = vmatpush1.bf16.msra.mxu0 0
        %2132 = vmatprep.mubr.bf16.mxu0 0
        %2133 = vmatmul.mubr.bf16.gmra.mrb[0].mxu0 %v2095
        %v2134 = vpop.f32.mrb[0].mxu0
        %v2135 = vadd.f32 0.0, %v2134
        %v2136 = vpop.f32.mrb[0].mxu0
        %v2137 = vpop.f32.mrb[0].mxu0
        %v2138 = vpop.f32.mrb[0].mxu0
        %2139 = vdwg.mxu0
        %v2140 = vrcp.pop %v1941
        %v2141 = vrcp.pop %v1944
        %v2142 = vrcp.pop %v1947
        %v2143 = vrcp.pop %v1950
        %v2144 = vmul.f32 %v1997, %v2140
        %v2145 = vmul.f32 %v2043, %v2141
        %v2146 = vmul.f32 %v2089, %v2142
        %v2147 = vmul.f32 %v2135, %v2143
        %v2148 = vcombine.low %v2144, %v2146
        %v2149 = vcombine.high %v2144, %v2146
        %v2151 = vunpack.c.l.s4 1983009808
        %v2152 = vunpack.c.0.s8 %v2151
        %v2153 = vlaneseq
        %v2154 = vshrl.u32 %v2153, 7
        %v2155 = vsub.s32 %v2152, %v2154
        %v2156 = vrot.slane %v2148, %v2155
        %v2158 = vunpack.c.l.s4 1983009808
        %v2159 = vunpack.c.0.s8 %v2158
        %v2160 = vlaneseq
        %v2161 = vshrl.u32 %v2160, 7
        %v2162 = vsub.s32 %v2159, %v2161
        %v2163 = vrot.slane %v2149, %v2162
        %v2164 = vcombine.low %v2145, %v2147
        %v2165 = vcombine.high %v2145, %v2147
        %v2167 = vunpack.c.l.s4 1983009808
        %v2168 = vunpack.c.0.s8 %v2167
        %v2169 = vlaneseq
        %v2170 = vshrl.u32 %v2169, 7
        %v2171 = vsub.s32 %v2168, %v2170
        %v2172 = vrot.slane %v2164, %v2171
        %v2174 = vunpack.c.l.s4 1983009808
        %v2175 = vunpack.c.0.s8 %v2174
        %v2176 = vlaneseq
        %v2177 = vshrl.u32 %v2176, 7
        %v2178 = vsub.s32 %v2175, %v2177
        %v2179 = vrot.slane %v2165, %v2178
        %v2180 = vcombine.low %v2156, %v2172
        %v2181 = vcombine.high %v2156, %v2172
        %v2183 = vunpack.c.l.s4 1934713408
        %v2184 = vunpack.c.0.s8 %v2183
        %v2185 = vlaneseq
        %v2186 = vshrl.u32 %v2185, 7
        %v2187 = vsub.s32 %v2184, %v2186
        %v2188 = vrot.slane %v2180, %v2187
        %v2190 = vunpack.c.l.s4 1934713408
        %v2191 = vunpack.c.0.s8 %v2190
        %v2192 = vlaneseq
        %v2193 = vshrl.u32 %v2192, 7
        %v2194 = vsub.s32 %v2191, %v2193
        %v2195 = vrot.slane %v2181, %v2194
        %v2196 = vcombine.low %v2163, %v2179
        %v2197 = vcombine.high %v2163, %v2179
        %v2199 = vunpack.c.l.s4 1934713408
        %v2200 = vunpack.c.0.s8 %v2199
        %v2201 = vlaneseq
        %v2202 = vshrl.u32 %v2201, 7
        %v2203 = vsub.s32 %v2200, %v2202
        %v2204 = vrot.slane %v2196, %v2203
        %v2206 = vunpack.c.l.s4 1934713408
        %v2207 = vunpack.c.0.s8 %v2206
        %v2208 = vlaneseq
        %v2209 = vshrl.u32 %v2208, 7
        %v2210 = vsub.s32 %v2207, %v2209
        %v2211 = vrot.slane %v2197, %v2210
        %v2212 = vcombine.high %v2188, 0.0
        %v2213 = vcombine.high %v2195, 0.0
        %v2214 = vcombine.high %v2204, 0.0
        %v2215 = vcombine.high %v2211, 0.0
        %v2216 = vcombine.low %v2188, %v2195
        %v2218 = vunpack.c.l.s4 1983009808
        %v2219 = vunpack.c.0.s8 %v2218
        %v2220 = vlaneseq
        %v2221 = vshrl.u32 %v2220, 7
        %v2222 = vsub.s32 %v2219, %v2221
        %v2223 = vrot.slane %v2216, %v2222
        %v2224 = vcombine.low %v2212, %v2213
        %v2226 = vunpack.c.l.s4 1983009808
        %v2227 = vunpack.c.0.s8 %v2226
        %v2228 = vlaneseq
        %v2229 = vshrl.u32 %v2228, 7
        %v2230 = vsub.s32 %v2227, %v2229
        %v2231 = vrot.slane %v2224, %v2230
        %v2232 = vcombine.low %v2204, %v2211
        %v2234 = vunpack.c.l.s4 1983009808
        %v2235 = vunpack.c.0.s8 %v2234
        %v2236 = vlaneseq
        %v2237 = vshrl.u32 %v2236, 7
        %v2238 = vsub.s32 %v2235, %v2237
        %v2239 = vrot.slane %v2232, %v2238
        %v2240 = vcombine.low %v2214, %v2215
        %v2242 = vunpack.c.l.s4 1983009808
        %v2243 = vunpack.c.0.s8 %v2242
        %v2244 = vlaneseq
        %v2245 = vshrl.u32 %v2244, 7
        %v2246 = vsub.s32 %v2243, %v2245
        %v2247 = vrot.slane %v2240, %v2246
        %v2248 = vcombine.low %v2223, %v2231
        %v2249 = vcombine.high %v2223, %v2231
        %v2251 = vunpack.c.l.s4 1934713408
        %v2252 = vunpack.c.0.s8 %v2251
        %v2253 = vlaneseq
        %v2254 = vshrl.u32 %v2253, 7
        %v2255 = vsub.s32 %v2252, %v2254
        %v2256 = vrot.slane %v2248, %v2255
        %v2258 = vunpack.c.l.s4 1934713408
        %v2259 = vunpack.c.0.s8 %v2258
        %v2260 = vlaneseq
        %v2261 = vshrl.u32 %v2260, 7
        %v2262 = vsub.s32 %v2259, %v2261
        %v2263 = vrot.slane %v2249, %v2262
        %v2264 = vcombine.low %v2239, %v2247
        %v2265 = vcombine.high %v2239, %v2247
        %v2267 = vunpack.c.l.s4 1934713408
        %v2268 = vunpack.c.0.s8 %v2267
        %v2269 = vlaneseq
        %v2270 = vshrl.u32 %v2269, 7
        %v2271 = vsub.s32 %v2268, %v2270
        %v2272 = vrot.slane %v2264, %v2271
        %v2274 = vunpack.c.l.s4 1934713408
        %v2275 = vunpack.c.0.s8 %v2274
        %v2276 = vlaneseq
        %v2277 = vshrl.u32 %v2276, 7
        %v2278 = vsub.s32 %v2275, %v2277
        %v2279 = vrot.slane %v2265, %v2278
        %v2280 = vcombine.low %v2256, %v2272
        %v2281 = vcombine.high %v2256, %v2272
        %v2282 = vcombine.low %v2263, %v2279
        %v2283 = vcombine.high %v2263, %v2279
        %2285 = vrot.lane.b32.xlu0 %v2281, 8
        %v2286 = vpop.permute.xlu0 %2285
        %2289 = vrot.lane.b32.xlu0 %v2282, 16
        %v2290 = vpop.permute.xlu0 %2289
        %2293 = vrot.lane.b32.xlu0 %v2283, 24
        %v2294 = vpop.permute.xlu0 %2293
        %v2296 = vsel %vm1546, %v2280, %v2286
        %vm2297 = vcmask 130048
        %v2298 = vsel %vm2297, %v2296, %v2290
        %vm2299 = vcmask 195584
        %v2300 = vsel %vm2299, %v2298, %v2294
        %v2301 = vpack.c.bf16 %v2300, %v2300
        %v2302 = vld [vmem:[%s7] sm:$0xf]
        %v2303 = vld [vmem:[%s7 + $0x4] sm:$0xf]
        %v2304 = vld [vmem:[%s7 + $0x8] sm:$0xf]
        %v2305 = vld [vmem:[%s7 + $0xc] sm:$0xf]
        %v2306 = vld [vmem:[%s8] sm:$0x1]
        %v2308 = vlaneseq
        %v2309 = vshrl.u32 %v2308, 7
        %v2310 = vsub.s32 0, %v2309
        %v2311 = vrot.slane %v2306, %v2310
        %v2317 = vunpack.c.l.b16 %v2302
        %v2318 = vunpack.c.l.b16 %v2303
        %v2319 = vunpack.c.l.b16 %v2304
        %v2320 = vunpack.c.l.b16 %v2305
        %v2321 = vpack.c.b16 %v2318, %v2317
        %v2322 = vpack.c.b16 %v2320, %v2319
        %v2326 = vsel %vm480, %v2301, 0
        %2328 = vmatprep.subr.bf16.mxu0 0
        %2329 = vmatpush1.bf16.msra.mxu0 %v2321
        %2330 = vmatprep.subr.bf16.mxu0 0
        %2331 = vmatpush1.bf16.msra.mxu0 %v2322
        %2332 = vmatprep.subr.bf16.mxu0 0
        %2333 = vmatpush1.bf16.msra.mxu0 0
        %2334 = vmatprep.subr.bf16.mxu0 0
        %2335 = vmatpush1.bf16.msra.mxu0 0
        %2336 = vmatprep.subr.bf16.mxu0 0
        %2337 = vmatpush1.bf16.msra.mxu0 0
        %2338 = vmatprep.subr.bf16.mxu0 0
        %2339 = vmatpush1.bf16.msra.mxu0 0
        %2340 = vmatprep.subr.bf16.mxu0 0
        %2341 = vmatpush1.bf16.msra.mxu0 0
        %2342 = vmatprep.subr.bf16.mxu0 0
        %2343 = vmatpush1.bf16.msra.mxu0 0
        %2344 = vmatprep.subr.bf16.mxu0 0
        %2345 = vmatpush1.bf16.msra.mxu0 0
        %2346 = vmatprep.subr.bf16.mxu0 0
        %2347 = vmatpush1.bf16.msra.mxu0 0
        %2348 = vmatprep.subr.bf16.mxu0 0
        %2349 = vmatpush1.bf16.msra.mxu0 0
        %2350 = vmatprep.subr.bf16.mxu0 0
        %2351 = vmatpush1.bf16.msra.mxu0 0
        %2352 = vmatprep.subr.bf16.mxu0 0
        %2353 = vmatpush1.bf16.msra.mxu0 0
        %2354 = vmatprep.subr.bf16.mxu0 0
        %2355 = vmatpush1.bf16.msra.mxu0 0
        %2356 = vmatprep.subr.bf16.mxu0 0
        %2357 = vmatpush1.bf16.msra.mxu0 0
        %2358 = vmatprep.subr.bf16.mxu0 0
        %2359 = vmatpush1.bf16.msra.mxu0 0
        %2360 = vmatprep.mubr.bf16.mxu0 0
        %2361 = vmatmul.mubr.bf16.gmra.mrb[0].mxu0 %v2326
        %v2362 = vpop.f32.mrb[0].mxu0
        %v2363 = vadd.f32 %v2311, %v2362
        %v2364 = vpop.f32.mrb[0].mxu0
        %v2365 = vpop.f32.mrb[0].mxu0
        %v2366 = vpop.f32.mrb[0].mxu0
        %2367 = vdwg.mxu0
        %v2368 = vadd.f32 %v2363, %v451
        %v2369 = vsel %vm480, %v2368, 0.0
        %2370 = vadd.xlane.f32.xlu0 %v2369
        %v2371 = vpop.xlane.xlu0 %2370
        %v2372 = vrcp.pop 32.0
        %v2373 = vmul.f32 %v2371, %v2372
        %v2374 = vmul.f32 %v2368, %v2368
        %v2375 = vsel %vm480, %v2374, 0.0
        %2376 = vadd.xlane.f32.xlu0 %v2375
        %v2377 = vpop.xlane.xlu0 %2376
        %v2378 = vmul.f32 %v2377, %v2372
        %v2379 = vmul.f32 %v2373, %v2373
        %v2380 = vsub.f32 %v2378, %v2379
        %v2381 = vsub.f32 %v2368, %v2373
        %v2382 = vadd.f32 %v2380, 1e-05
        %v2383 = vrsqrt.pop %v2382
        %v2384 = vmul.f32 %v2381, %v2383
        %v2385 = vld [vmem:[%s9] sm:$0x1]
        %v2387 = vlaneseq
        %v2388 = vshrl.u32 %v2387, 7
        %v2389 = vsub.s32 0, %v2388
        %v2390 = vrot.slane %v2385, %v2389
        %v2392 = vmul.f32 %v2384, %v2390
        %v2393 = vld [vmem:[%s10] sm:$0x1]
        %v2395 = vlaneseq
        %v2396 = vshrl.u32 %v2395, 7
        %v2397 = vsub.s32 0, %v2396
        %v2398 = vrot.slane %v2393, %v2397
        %v2400 = vadd.f32 %v2392, %v2398
        %2401 = vst.msk [vmem:[%s429] sm:$0xff] %vm480, %v2400
        %s2402 = sand.u32 %s289, 1
        %s2403 = scalar_lea.sflag [#allocation3], %s2402
        %s2404 = sand.u32 %s289, 1
        %s2405 = smul.addr %s2404, 8
        %s2406 = scalar_lea.vmem [#allocation2], %s2405
        // Predicated region
        $region65: #{mix_attention2_forward.1} parent=63 // pred_check
          %p2407 = pneg %p299
        $region66: #{mix_attention2_forward.1} parent=63 // pred_check_branch
          %2409 = sbr.rel (%p2407) target = $region68
        $region67: #{mix_attention2_forward.1} parent=63 // pred_region
          %s2411 = ssub.s32 128, 128
          %2412 = vsyncadd %s2403, %s2411
          %s2413 = smul.addr %s25, 128
          %s2414 = scalar_lea.hbm %s11, %s2413
          %s2416 = sshll.u32 %s2406, 4
          %s2417 = int_to_ptr.vmem [resolvable:$true] %s2416
          %2419 = dma.vmem_to_hbm [thread:$0]  %s2417, 128, %s2414, %s2403
        $region68: #{mix_attention2_forward.1} parent=63 // pred_fallthru
          _
      $region64: #{mix_attention2_forward.1} parent=5 // pred_fallthru
        _
      %p2420 = scmp.le.s32.totalorder 2, %s20
      // Predicated region
      $region69: #{mix_attention2_forward.1} parent=5 // pred_check
        %p2421 = pneg %p2420
      $region70: #{mix_attention2_forward.1} parent=5 // pred_check_branch
        %2423 = sbr.rel (%p2421) target = $region72
      $region71: #{mix_attention2_forward.1} parent=5 // pred_region
        %s2424 = ssub.s32 %s20, 2
        // Predicated region
        $region73: #{mix_attention2_forward.1} parent=71 // pred_check
          %p2425 = pneg %p305
        $region74: #{mix_attention2_forward.1} parent=71 // pred_check_branch
          %2427 = sbr.rel (%p2425) target = $region76
        $region75: #{mix_attention2_forward.1} parent=71 // pred_region
          %s2428 = sand.u32 %s290, 1
          %s2429 = scalar_lea.sflag [#allocation3], %s2428
          %s2430 = sand.u32 %s290, 1
          %s2431 = smul.addr %s2430, 8
          %s2432 = scalar_lea.vmem [#allocation2], %s2431
          %2433 = dma.done %s2429, 128
        $region76: #{mix_attention2_forward.1} parent=71 // pred_fallthru
          _
      $region72: #{mix_attention2_forward.1} parent=5 // pred_fallthru
        _
    $region6: #{mix_attention2_forward.1} parent=1 // loop_footer
      %s24 = sadd.s32 1, %s20
    $region7: #{mix_attention2_forward.1} parent=1 // loop_footer_branch
      %19 = sbr.rel target = $region3
    $region8: #{mix_attention2_forward.1} parent=1 // loop_exit
      _
    %2434 = vsyncpa [#allocation3], 1
    %s2435 = scalar_lea.sflag [#allocation3], 1
    %2436 = vsyncpa %s2435, 1

</llo_original>
